<compile_context>
chip_gen: v7x
topology: tpu7x:2x2x1
jax: 0.10.0
libtpu: 0.0.40
codegen_flags: <defaults>
</compile_context>

<pallas_src>
import functools

import jax
import jax.numpy as jnp
from jax.experimental import pallas as pl
from jax.experimental.pallas import tpu as pltpu

LANE = 128
# Capped at 512: measured HBM efficiency barely improves 512 -> 1024, and
# smaller tiles reduce f32-intermediate store traffic / vreg pressure (v5e has
# a single vector-store slot per bundle).
_ROW_TILE_CANDIDATES = (512, 256, 128, 64, 32, 16, 8)


def _round_up(x, m):
    return (x + m - 1) // m * m


def _cdiv(a, b):
    return -(-a // b)


def _row_granule(itemsize):
    # Native sublane packing: f32 -> 8 rows / vreg, bf16 -> 16, int8/fp8 -> 32.
    return {4: 8, 2: 16, 1: 32}.get(itemsize, 8)


def _vmem_capacity_bytes():
    try:
        return int(pltpu.get_tpu_info().vmem_capacity_bytes)
    except Exception:
        return 64 * 1024 * 1024  # conservative: v7x physical VMEM per TensorCore


# ----------------------------------------------------------------------------
# One-time parameter preparation (do NOT call per forward pass)
# ----------------------------------------------------------------------------
def prepare_adapter_params(w1, w2, lane=LANE):
    """Transpose + lane-pad the Adapter weights once at parameter-load time.

    w1: (hidden, c_in), w2: (c_in, hidden)  -- PyTorch nn.Linear layout.
    Returns w1t: (c_in_p, hidden_p), w2t: (hidden_p, c_in_p), zero-padded.
    """
    hidden, c_in = w1.shape
    c_in_p = _round_up(c_in, lane)
    hidden_p = _round_up(hidden, lane)
    w1t = jnp.zeros((c_in_p, hidden_p), w1.dtype).at[:c_in, :hidden].set(w1.T)
    w2t = jnp.zeros((hidden_p, c_in_p), w2.dtype).at[:hidden, :c_in].set(w2.T)
    return w1t, w2t


# ----------------------------------------------------------------------------
# Kernels
# ----------------------------------------------------------------------------
def _adapter_resident_kernel(x_ref, w1t_ref, w2t_ref, o_ref, *, precision):
    # matmul -> ReLU -> matmul -> ReLU, fully on-chip for this row tile.
    h = jnp.dot(x_ref[...], w1t_ref[...],
                preferred_element_type=jnp.float32, precision=precision)
    h = jnp.maximum(h, 0.0)
    y = jnp.dot(h.astype(w2t_ref.dtype), w2t_ref[...],
                preferred_element_type=jnp.float32, precision=precision)
    o_ref[...] = jnp.maximum(y, 0.0).astype(o_ref.dtype)


def _adapter_streaming_kernel(x_ref, w1t_ref, w2t_ref, o_ref, acc_ref, *,
                              precision):
    # Weight-streaming fallback: hidden dim tiled on grid axis 1 ("arbitrary").
    # ReLU on h is elementwise over hidden, so per-chunk application is exact;
    # the second matmul is a sum over hidden chunks accumulated in f32.
    j = pl.program_id(1)

    @pl.when(j == 0)
    def _():
        acc_ref[...] = jnp.zeros_like(acc_ref)

    h = jnp.dot(x_ref[...], w1t_ref[...],
                preferred_element_type=jnp.float32, precision=precision)
    h = jnp.maximum(h, 0.0)
    acc_ref[...] += jnp.dot(h.astype(w2t_ref.dtype), w2t_ref[...],
                            preferred_element_type=jnp.float32,
                            precision=precision)

    @pl.when(j == pl.num_programs(1) - 1)
    def _():
        o_ref[...] = jnp.maximum(acc_ref[...], 0.0).astype(o_ref.dtype)


# ----------------------------------------------------------------------------
# Tile selection against a chip-derived VMEM budget
# ----------------------------------------------------------------------------
def _row_candidates(n, granule):
    max_tn = max(_round_up(n, granule), granule)
    cands = [t for t in _ROW_TILE_CANDIDATES
             if t % granule == 0 and t <= max_tn]
    return cands or [granule]


def _choose_resident_rows(n, c_in_p, hidden_p, itemsize, granule, budget):
    # Weights single-buffered (pl.Buffered(1)); x / out double-buffered stream.
    weight_bytes = 2 * c_in_p * hidden_p * itemsize
    for tn in _row_candidates(n, granule):
        stream_bytes = 2 * 2 * tn * c_in_p * itemsize
        interm_bytes = tn * hidden_p * 4 + tn * c_in_p * 4  # f32 h / y
        if weight_bytes + stream_bytes + interm_bytes <= budget:
            return tn
    return None


def _choose_streaming_tiles(n, c_in_p, hidden_p, itemsize, granule, budget):
    th_cands = [t for t in range(hidden_p, 0, -LANE) if hidden_p % t == 0]
    # Prefer large row tiles first: weights are re-streamed once per row tile.
    for tn in _row_candidates(n, granule):
        for th in th_cands:
            weight_bytes = 2 * 2 * c_in_p * th * itemsize  # double-buffered
            stream_bytes = 2 * 2 * tn * c_in_p * itemsize  # x + out
            acc_bytes = tn * c_in_p * 4
            interm_bytes = tn * th * 4 + tn * c_in_p * 4
            if (weight_bytes + stream_bytes + acc_bytes + interm_bytes
                    <= budget):
                return tn, th
    return None


# ----------------------------------------------------------------------------
# Forward wrapper
# ----------------------------------------------------------------------------
def adapter_forward(x, w1t, w2t, *, hidden=None, precision=None,
                    vmem_budget=None, force_streaming=False):
    """x: (..., c_in).  w1t/w2t: from prepare_adapter_params().
    precision: optional MXU precision (e.g. jax.lax.Precision.HIGHEST) —
    default None keeps native throughput (important on v5e)."""
    orig_shape = x.shape
    c_in = orig_shape[-1]
    if x.ndim != 2:
        x = x.reshape(-1, c_in)
    n = x.shape[0]

    c_in_p, hidden_p = w1t.shape
    assert w2t.shape == (hidden_p, c_in_p)
    itemsize = jnp.dtype(x.dtype).itemsize
    w_itemsize = jnp.dtype(w1t.dtype).itemsize
    granule = _row_granule(itemsize)
    hidden_true = hidden if hidden is not None else hidden_p

    capacity = _vmem_capacity_bytes()
    budget = int(capacity * 0.70) if vmem_budget is None else int(vmem_budget)
    vmem_limit = int(capacity * 0.90)

    # Lane-pad x only when c_in isn't a lane multiple (zero pad is exact; OOB
    # lane contents would be unspecified, and 0-weight * NaN is not safe).
    x_in = x if c_in_p == c_in else jnp.pad(x, ((0, 0), (0, c_in_p - c_in)))

    cost = pl.CostEstimate(
        flops=2 * 2 * n * c_in * hidden_true,
        transcendentals=0,
        bytes_accessed=(2 * n * c_in * itemsize            # x in + out
                        + 2 * c_in_p * hidden_p * w_itemsize),
    )
    compiler_params = dict(vmem_limit_bytes=vmem_limit)

    tn = None
    if not force_streaming:
        tn = _choose_resident_rows(n, c_in_p, hidden_p, w_itemsize, granule,
                                   budget)

    if tn is not None:
        # Keep >= 2 row tiles when possible so the "parallel" axis can shard
        # across v7x's two TensorCores (negligible cost on v5e/v6e).
        if _cdiv(n, tn) < 2 and _round_up(n, granule) > granule:
            tn = min(tn, max(_round_up(_cdiv(n, 2), granule), granule))
        kernel = functools.partial(_adapter_resident_kernel,
                                   precision=precision)
        out = pl.pallas_call(
            kernel,
            out_shape=jax.ShapeDtypeStruct((n, c_in_p), x.dtype),
            grid_spec=pltpu.PrefetchScalarGridSpec(
                num_scalar_prefetch=0,
                grid=(_cdiv(n, tn),),
                in_specs=[
                    # Activation rows stream through VMEM (double-buffered).
                    pl.BlockSpec((tn, c_in_p), lambda i: (i, 0)),
                    # Weights: constant index_map -> fetched once, resident;
                    # single-buffered (nothing to double-buffer).
                    pl.BlockSpec((c_in_p, hidden_p), lambda i: (0, 0),
                                 pipeline_mode=pl.Buffered(1)),
                    pl.BlockSpec((hidden_p, c_in_p), lambda i: (0, 0),
                                 pipeline_mode=pl.Buffered(1)),
                ],
                out_specs=pl.BlockSpec((tn, c_in_p), lambda i: (i, 0)),
            ),
            compiler_params=pltpu.CompilerParams(
                dimension_semantics=("parallel",), **compiler_params),
            cost_estimate=cost,
        )(x_in, w1t, w2t)
    else:
        tiles = _choose_streaming_tiles(n, c_in_p, hidden_p, w_itemsize,
                                        granule, budget)
        if tiles is None:
            raise ValueError(
                "Adapter weights too large for the VMEM budget even when "
                f"streamed (c_in_p={c_in_p}, hidden_p={hidden_p}, "
                f"budget={budget} bytes)")
        tn, th = tiles
        kernel = functools.partial(_adapter_streaming_kernel,
                                   precision=precision)
        out = pl.pallas_call(
            kernel,
            out_shape=jax.ShapeDtypeStruct((n, c_in_p), x.dtype),
            grid_spec=pltpu.PrefetchScalarGridSpec(
                num_scalar_prefetch=0,
                grid=(_cdiv(n, tn), hidden_p // th),
                in_specs=[
                    pl.BlockSpec((tn, c_in_p), lambda i, j: (i, 0)),
                    pl.BlockSpec((c_in_p, th), lambda i, j: (0, j)),
                    pl.BlockSpec((th, c_in_p), lambda i, j: (j, 0)),
                ],
                out_specs=pl.BlockSpec((tn, c_in_p), lambda i, j: (i, 0)),
                scratch_shapes=[pltpu.VMEM((tn, c_in_p), jnp.float32)],
            ),
            compiler_params=pltpu.CompilerParams(
                dimension_semantics=("parallel", "arbitrary"),
                **compiler_params),
            cost_estimate=cost,
        )(x_in, w1t, w2t)

    if c_in_p != c_in:
        out = out[:, :c_in]
    return out.reshape(orig_shape)


# ----------------------------------------------------------------------------
# Demo / correctness check
# ----------------------------------------------------------------------------
if __name__ == "__main__":
    key = jax.random.PRNGKey(0)
    k1, k2, k3, k4, k5, k6 = jax.random.split(key, 6)

    def _ref(x, w1, w2):
        with jax.default_matmul_precision("highest"):
            return jnp.maximum(jnp.maximum(x @ w1.T, 0.0) @ w2.T, 0.0)

    # ---- Test 1: resident-weight fast path, ragged rows, lane-padded c_in ----
    N1, C1, RED1 = 10, 32, 4
    H1 = C1 // RED1
    x1 = jax.random.normal(k1, (N1, C1), dtype=jnp.float32)
    w1a = jax.random.normal(k2, (H1, C1), jnp.float32) * (1.0 / C1 ** 0.5)
    w2a = jax.random.normal(k3, (C1, H1), jnp.float32) * (1.0 / H1 ** 0.5)
    w1t_a, w2t_a = prepare_adapter_params(w1a, w2a)
    out1 = adapter_forward(x1, w1t_a, w2t_a, hidden=H1,
                           precision=jax.lax.Precision.HIGHEST)
    jax.block_until_ready(out1)
    ref1 = _ref(x1, w1a, w2a)
    assert out1.shape == (N1, C1)
    assert jnp.allclose(out1, ref1, atol=2e-4, rtol=2e-4), \
        float(jnp.max(jnp.abs(out1 - ref1)))

    # ---- Test 2: weight-streaming fallback (forced small VMEM budget) ----
    N2, C2, RED2 = 64, 512, 2
    H2 = C2 // RED2
    x2 = jax.random.normal(k4, (N2, C2), dtype=jnp.float32)
    w1b = jax.random.normal(k5, (H2, C2), jnp.float32) * (1.0 / C2 ** 0.5)
    w2b = jax.random.normal(k6, (C2, H2), jnp.float32) * (1.0 / H2 ** 0.5)
    w1t_b, w2t_b = prepare_adapter_params(w1b, w2b)
    out2 = adapter_forward(x2, w1t_b, w2t_b, hidden=H2,
                           precision=jax.lax.Precision.HIGHEST,
                           vmem_budget=3 * 512 * 1024,   # forces th=128, tn small
                           force_streaming=True)
    jax.block_until_ready(out2)
    ref2 = _ref(x2, w1b, w2b)
    assert out2.shape == (N2, C2)
    assert jnp.allclose(out2, ref2, atol=2e-4, rtol=2e-4), \
        float(jnp.max(jnp.abs(out2 - ref2)))

    print("KERNEL_OK")
</pallas_src>

<mosaic_0001>
module attributes {stable_mosaic.version = 11 : i64} {
  func.func @_adapter_resident_kernel(%arg0: i32, %arg1: memref<8x128xf32, #tpu.memory_space<vmem>>, %arg2: memref<128x128xf32, #tpu.memory_space<vmem>>, %arg3: memref<128x128xf32, #tpu.memory_space<vmem>>, %arg4: memref<8x128xf32, #tpu.memory_space<vmem>>) attributes {dimension_semantics = [#tpu.dimension_semantics<parallel>], iteration_bounds = array<i64: 2>, scalar_prefetch = 0 : i64, scratch_operands = 0 : i64, tpu.core_type = #tpu.core_type<tc>, window_params = [{transform_indices = @transform_0, window_bounds = array<i64: 8, 128>}, {pipeline_mode = #tpu.pipeline_mode<synchronous>, transform_indices = @transform_1, window_bounds = array<i64: 128, 128>}, {pipeline_mode = #tpu.pipeline_mode<synchronous>, transform_indices = @transform_2, window_bounds = array<i64: 128, 128>}, {transform_indices = @transform_3, window_bounds = array<i64: 8, 128>}]} {
    %c0 = arith.constant 0 : index
    %c0_0 = arith.constant 0 : index
    %0 = vector.load %arg1[%c0, %c0_0] : memref<8x128xf32, #tpu.memory_space<vmem>>, vector<8x128xf32>
    %c0_1 = arith.constant 0 : index
    %c0_2 = arith.constant 0 : index
    %1 = vector.load %arg2[%c0_1, %c0_2] : memref<128x128xf32, #tpu.memory_space<vmem>>, vector<128x128xf32>
    %cst = arith.constant dense<0.000000e+00> : vector<8x128xf32>
    %2 = tpu.matmul %0, %1, %cst {dimension_numbers = #tpu.dot_dimension_numbers<[1], [0], [0], [1], [0, 0, 1, 1], [], []>, precision = #tpu.contract_precision<fp32>} : vector<8x128xf32>, vector<128x128xf32>, vector<8x128xf32> -> vector<8x128xf32>
    %cst_3 = arith.constant 0.000000e+00 : f32
    %3 = vector.broadcast %cst_3 : f32 to vector<8x128xf32>
    %4 = arith.maximumf %2, %3 : vector<8x128xf32>
    %c0_4 = arith.constant 0 : index
    %c0_5 = arith.constant 0 : index
    %5 = vector.load %arg3[%c0_4, %c0_5] : memref<128x128xf32, #tpu.memory_space<vmem>>, vector<128x128xf32>
    %cst_6 = arith.constant dense<0.000000e+00> : vector<8x128xf32>
    %6 = tpu.matmul %4, %5, %cst_6 {dimension_numbers = #tpu.dot_dimension_numbers<[1], [0], [0], [1], [0, 0, 1, 1], [], []>, precision = #tpu.contract_precision<fp32>} : vector<8x128xf32>, vector<128x128xf32>, vector<8x128xf32> -> vector<8x128xf32>
    %cst_7 = arith.constant 0.000000e+00 : f32
    %7 = vector.broadcast %cst_7 : f32 to vector<8x128xf32>
    %8 = arith.maximumf %6, %7 : vector<8x128xf32>
    %c0_8 = arith.constant 0 : index
    %c0_9 = arith.constant 0 : index
    %9 = vector.load %arg4[%c0_8, %c0_9] : memref<8x128xf32, #tpu.memory_space<vmem>>, vector<8x128xf32>
    tpu.vector_store %arg4[%c0_8, %c0_9], %8 {strides = array<i32>} : memref<8x128xf32, #tpu.memory_space<vmem>>, vector<8x128xf32>,
    return
  }
  func.func @transform_0(%arg0: i32) -> (i32, i32) {
    %c0_i32 = arith.constant 0 : i32
    %c0_i32_0 = arith.constant 0 : i32
    return %arg0, %c0_i32 : i32, i32
  }
  func.func @transform_1(%arg0: i32) -> (i32, i32) {
    %c0_i32 = arith.constant 0 : i32
    %c0_i32_0 = arith.constant 0 : i32
    %c0_i32_1 = arith.constant 0 : i32
    return %c0_i32, %c0_i32_0 : i32, i32
  }
  func.func @transform_2(%arg0: i32) -> (i32, i32) {
    %c0_i32 = arith.constant 0 : i32
    %c0_i32_0 = arith.constant 0 : i32
    %c0_i32_1 = arith.constant 0 : i32
    return %c0_i32, %c0_i32_0 : i32, i32
  }
  func.func @transform_3(%arg0: i32) -> (i32, i32) {
    %c0_i32 = arith.constant 0 : i32
    %c0_i32_0 = arith.constant 0 : i32
    return %arg0, %c0_i32 : i32, i32
  }
}

</mosaic_0001>

<llo_original>
// kernel: tpu_custom_call.1
$region0: #{tpu_custom_call.1}
  #allocation0 [shape = 'u32[]', space=smem, size = 0x4, offset = 0x4, fixed_abs, tag = 'smem constant byte address 0x4 - core index']
  #allocation1 [shape = 'u32[144,128]{1,0:T(1,128)}', space=vmem, size = 0x12000, scoped, tag = 'internal scratch']
  %s0 = inlined_call_operand.hbm [shape: f32[10,128], index: 0, kind: input, shape index: {}]
  %s1 = inlined_call_operand.hbm [shape: f32[128,128], index: 1, kind: input, shape index: {}]
  %s2 = inlined_call_operand.hbm [shape: f32[128,128], index: 2, kind: input, shape index: {}]
  %s3 = inlined_call_operand.hbm [shape: f32[10,128], index: 3, kind: output, shape index: {}]
  %s4 = sld [smem:[#allocation0]]
  $region57: #{tpu_custom_call.1} parent=0
    _
  %s6 = ssub.s32 1, %s4
  %s7 = scalar_select 0, %s6, %s4
  $region1: #{tpu_custom_call.1} parent=0
    #allocation2 [shape = 'u8[8192]{0}', space=vmem, size = 0x2000, scoped, tag = 'input window, operand 0']
    #allocation3 [shape = 's32[2]{0}', space=sflag, size = 0x8, scoped, tag = 'scoped memory for tpu_custom_call.1']
    #allocation4 [shape = 's32[2]{0}', space=sflag, size = 0x8, scoped, tag = 'scoped memory for tpu_custom_call.1']
    #allocation5 [shape = 'u8[65536]{0}', space=vmem, size = 0x10000, scoped, tag = 'input window, operand 1, single buffered']
    #allocation6 [shape = 's32[1]{0}', space=sflag, size = 0x4, scoped, tag = 'scoped memory for tpu_custom_call.1']
    #allocation7 [shape = 'u8[65536]{0}', space=vmem, size = 0x10000, scoped, tag = 'input window, operand 2, single buffered']
    #allocation8 [shape = 'u8[8192]{0}', space=vmem, size = 0x2000, scoped, tag = 'output window, operand 0']
    %8 = vsyncpa [#allocation3], 0
    %s9 = scalar_lea.sflag [#allocation3], 1
    %10 = vsyncpa %s9, 0
    %11 = vsyncpa [#allocation6], 0
    %12 = vsyncpa [#allocation4], 0
    %s13 = scalar_lea.sflag [#allocation4], 1
    %14 = vsyncpa %s13, 0
    loop: start=0, step=1, limit=4
    $region2: #{tpu_custom_call.1} parent=1 // loop_pre_header
      _
    $region3: #{tpu_custom_call.1} parent=1 // loop_header
      %s16 = sphi 0, %s20
      %p17 = scmp.ge.s32.totalorder %s16, 4
      %s26 = sphi 0, %s28
      %s29 = sphi 0, %s26
      %s30 = sphi 0, %s29
      %s46 = sphi 0, %s30
      %s50 = sphi 0, %s50
      %s52 = sphi 0, %s50
      %s53 = sphi 0, %s52
      %s67 = sphi 0, %s53
      %s71 = sphi 0, %s71
      %s73 = sphi 0, %s71
      %s74 = sphi 0, %s73
      %s88 = sphi 0, %s74
      %s94 = sphi 0, %s96
      %s97 = sphi 0, %s94
      %s98 = sphi 0, %s97
      %s114 = sphi 0, %s98
    $region4: #{tpu_custom_call.1} parent=1 // loop_header_branch
      %19 = sbr.rel (%p17) target = $region8
    $region5: #{tpu_custom_call.1} parent=1 // loop_body
      %s21 = ssub.s32 %s16, 1
      %s22 = ssub.s32 %s16, 2
      %s23 = sadd.s32 %s16, 1
      %s24 = ssub.s32 %s16, %s23
      %p25 = scmp.eq.s32.totalorder %s24, 0
      %s27 = sadd.s32 %s26, 1
      %s28 = scalar_select %p25, %s26, %s27
      %p31 = pneg %p25
      %p32 = scmp.eq.s32.totalorder %s16, 1
      %p33 = por %p31, %p32
      %p34 = scmp.ne.s32.totalorder %s26, %s29
      %p35 = scmp.eq.s32.totalorder %s16, 0
      %p36 = por %p34, %p35
      %p37 = scmp.ne.s32.totalorder %s26, %s29
      %p38 = scmp.eq.s32.totalorder %s21, 1
      %p39 = por %p37, %p38
      %p40 = scmp.ne.s32.totalorder %s29, %s30
      %p41 = scmp.eq.s32.totalorder %s21, 0
      %p42 = por %p40, %p41
      %p43 = scmp.ne.s32.totalorder %s29, %s30
      %p44 = scmp.eq.s32.totalorder %s22, 1
      %p45 = por %p43, %p44
      %p47 = scmp.ne.s32.totalorder %s30, %s46
      %p48 = scmp.eq.s32.totalorder %s22, 0
      %p49 = por %p47, %p48
      %s51 = sadd.s32 %s50, 1
      %p54 = scmp.eq.s32.totalorder %s16, 1
      %p55 = scmp.ne.s32.totalorder %s50, %s52
      %p56 = scmp.eq.s32.totalorder %s16, 0
      %p57 = por %p55, %p56
      %p58 = scmp.ne.s32.totalorder %s50, %s52
      %p59 = scmp.eq.s32.totalorder %s21, 1
      %p60 = por %p58, %p59
      %p61 = scmp.ne.s32.totalorder %s52, %s53
      %p62 = scmp.eq.s32.totalorder %s21, 0
      %p63 = por %p61, %p62
      %p64 = scmp.ne.s32.totalorder %s52, %s53
      %p65 = scmp.eq.s32.totalorder %s22, 1
      %p66 = por %p64, %p65
      %p68 = scmp.ne.s32.totalorder %s53, %s67
      %p69 = scmp.eq.s32.totalorder %s22, 0
      %p70 = por %p68, %p69
      %s72 = sadd.s32 %s71, 1
      %p75 = scmp.eq.s32.totalorder %s16, 1
      %p76 = scmp.ne.s32.totalorder %s71, %s73
      %p77 = scmp.eq.s32.totalorder %s16, 0
      %p78 = por %p76, %p77
      %p79 = scmp.ne.s32.totalorder %s71, %s73
      %p80 = scmp.eq.s32.totalorder %s21, 1
      %p81 = por %p79, %p80
      %p82 = scmp.ne.s32.totalorder %s73, %s74
      %p83 = scmp.eq.s32.totalorder %s21, 0
      %p84 = por %p82, %p83
      %p85 = scmp.ne.s32.totalorder %s73, %s74
      %p86 = scmp.eq.s32.totalorder %s22, 1
      %p87 = por %p85, %p86
      %p89 = scmp.ne.s32.totalorder %s74, %s88
      %p90 = scmp.eq.s32.totalorder %s22, 0
      %p91 = por %p89, %p90
      %s92 = ssub.s32 %s16, %s23
      %p93 = scmp.eq.s32.totalorder %s92, 0
      %s95 = sadd.s32 %s94, 1
      %s96 = scalar_select %p93, %s94, %s95
      %p99 = pneg %p93
      %p100 = scmp.eq.s32.totalorder %s16, 1
      %p101 = por %p99, %p100
      %p102 = scmp.ne.s32.totalorder %s94, %s97
      %p103 = scmp.eq.s32.totalorder %s16, 0
      %p104 = por %p102, %p103
      %p105 = scmp.ne.s32.totalorder %s94, %s97
      %p106 = scmp.eq.s32.totalorder %s21, 1
      %p107 = por %p105, %p106
      %p108 = scmp.ne.s32.totalorder %s97, %s98
      %p109 = scmp.eq.s32.totalorder %s21, 0
      %p110 = por %p108, %p109
      %p111 = scmp.ne.s32.totalorder %s97, %s98
      %p112 = scmp.eq.s32.totalorder %s22, 1
      %p113 = por %p111, %p112
      %p115 = scmp.ne.s32.totalorder %s98, %s114
      %p116 = scmp.eq.s32.totalorder %s22, 0
      %p117 = por %p115, %p116
      %p118 = scmp.le.s32.totalorder 1, %s16
      %p119 = scmp.lt.s32.totalorder %s16, 3
      %p120 = pnand %p118, %p119
      %p121 = pneg %p120
      // Predicated region
      $region9: #{tpu_custom_call.1} parent=5 // pred_check
        _
      $region10: #{tpu_custom_call.1} parent=5 // pred_check_branch
        %123 = sbr.rel (%p120) target = $region12
      $region11: #{tpu_custom_call.1} parent=5 // pred_region
        %s124 = ssub.s32 %s16, 1
        // Predicated region
        $region13: #{tpu_custom_call.1} parent=11 // pred_check
          %p125 = pneg %p63
        $region14: #{tpu_custom_call.1} parent=11 // pred_check_branch
          %127 = sbr.rel (%p125) target = $region16
        $region15: #{tpu_custom_call.1} parent=11 // pred_region
          %s129 = ssub.s32 2048, 2048
          %130 = vsyncadd [#allocation6], %s129
          %s131 = sshll.u32 [#allocation5], 4
          %s132 = int_to_ptr.vmem [resolvable:$true] %s131
          %137 = dma.hbm_to_vmem [thread:$0]  %s1, 2048, %s132, [#allocation6], 128, 128, 8
        $region16: #{tpu_custom_call.1} parent=11 // pred_fallthru
          _
        // Predicated region
        $region17: #{tpu_custom_call.1} parent=11 // pred_check
          %p138 = pneg %p84
        $region18: #{tpu_custom_call.1} parent=11 // pred_check_branch
          %140 = sbr.rel (%p138) target = $region20
        $region19: #{tpu_custom_call.1} parent=11 // pred_region
          %s142 = ssub.s32 2048, 2048
          %143 = vsyncadd [#allocation6], %s142
          %s144 = sshll.u32 [#allocation7], 4
          %s145 = int_to_ptr.vmem [resolvable:$true] %s144
          %150 = dma.hbm_to_vmem [thread:$0]  %s2, 2048, %s145, [#allocation6], 128, 128, 8
        $region20: #{tpu_custom_call.1} parent=11 // pred_fallthru
          _
      $region12: #{tpu_custom_call.1} parent=5 // pred_fallthru
        _
      %p151 = scmp.lt.s32.totalorder %s16, 2
      // Predicated region
      $region21: #{tpu_custom_call.1} parent=5 // pred_check
        %p152 = pneg %p151
      $region22: #{tpu_custom_call.1} parent=5 // pred_check_branch
        %154 = sbr.rel (%p152) target = $region24
      $region23: #{tpu_custom_call.1} parent=5 // pred_region
        // Predicated region
        $region25: #{tpu_custom_call.1} parent=23 // pred_check
          %p155 = pneg %p36
        $region26: #{tpu_custom_call.1} parent=23 // pred_check_branch
          %157 = sbr.rel (%p155) target = $region28
        $region27: #{tpu_custom_call.1} parent=23 // pred_region
          %s158 = sand.u32 %s26, 1
          %s159 = scalar_lea.sflag [#allocation3], %s158
          %s160 = sand.u32 %s26, 1
          %s161 = smul.addr %s160, 8
          %s162 = scalar_lea.vmem [#allocation2], %s161
          %s164 = ssub.s32 128, 128
          %165 = vsyncadd %s159, %s164
          %s166 = smul.addr %s16, 128
          %s167 = scalar_lea.hbm %s0, %s166
          %s169 = sshll.u32 %s162, 4
          %s170 = int_to_ptr.vmem [resolvable:$true] %s169
          %172 = dma.hbm_to_vmem [thread:$0]  %s167, 128, %s170, %s159
        $region28: #{tpu_custom_call.1} parent=23 // pred_fallthru
          _
      $region24: #{tpu_custom_call.1} parent=5 // pred_fallthru
        _
      %p173 = scmp.le.s32.totalorder 1, %s16
      %p174 = scmp.lt.s32.totalorder %s16, 3
      %p175 = pnand %p173, %p174
      %p176 = pneg %p175
      // Predicated region
      $region29: #{tpu_custom_call.1} parent=5 // pred_check
        _
      $region30: #{tpu_custom_call.1} parent=5 // pred_check_branch
        %178 = sbr.rel (%p175) target = $region32
      $region31: #{tpu_custom_call.1} parent=5 // pred_region
        %s179 = ssub.s32 %s16, 1
        %s180 = sand.u32 %s29, 1
        %s181 = scalar_lea.sflag [#allocation3], %s180
        %s182 = sand.u32 %s29, 1
        %s183 = smul.addr %s182, 8
        %s184 = scalar_lea.vmem [#allocation2], %s183
        // Predicated region
        $region33: #{tpu_custom_call.1} parent=31 // pred_check
          %p185 = pneg %p42
        $region34: #{tpu_custom_call.1} parent=31 // pred_check_branch
          %187 = sbr.rel (%p185) target = $region36
        $region35: #{tpu_custom_call.1} parent=31 // pred_region
          %188 = dma.done %s181, 128
        $region36: #{tpu_custom_call.1} parent=31 // pred_fallthru
          _
        // Predicated region
        $region37: #{tpu_custom_call.1} parent=31 // pred_check
          %p189 = pneg %p63
        $region38: #{tpu_custom_call.1} parent=31 // pred_check_branch
          %191 = sbr.rel (%p189) target = $region40
        $region39: #{tpu_custom_call.1} parent=31 // pred_region
          %192 = dma.done [#allocation6], 2048
        $region40: #{tpu_custom_call.1} parent=31 // pred_fallthru
          _
        // Predicated region
        $region41: #{tpu_custom_call.1} parent=31 // pred_check
          %p193 = pneg %p84
        $region42: #{tpu_custom_call.1} parent=31 // pred_check_branch
          %195 = sbr.rel (%p193) target = $region44
        $region43: #{tpu_custom_call.1} parent=31 // pred_region
          %196 = dma.done [#allocation6], 2048
        $region44: #{tpu_custom_call.1} parent=31 // pred_fallthru
          _
        %s197 = sand.u32 %s29, 1
        %s198 = scalar_lea.sflag [#allocation3], %s197
        %s199 = sand.u32 %s29, 1
        %s200 = smul.addr %s199, 8
        %s201 = scalar_lea.vmem [#allocation2], %s200
        %p202 = pneg %p42
        %p203 = pneg %p39
        %p204 = pneg %p63
        %p205 = pneg %p60
        %p206 = pneg %p84
        %p207 = pneg %p81
        %p208 = pneg %p110
        %p209 = pneg %p107
        %s210 = sand.u32 %s97, 1
        %s211 = scalar_lea.sflag [#allocation4], %s210
        %s212 = sand.u32 %s97, 1
        %s213 = smul.addr %s212, 8
        %s214 = scalar_lea.vmem [#allocation8], %s213
        %v215 = vld [vmem:[%s184] sm:$0xff]
        %v216 = vld [vmem:[#allocation5] sm:$0xff]
        %v217 = vld [vmem:[#allocation5 + $0x8] sm:$0xff]
        %v218 = vld [vmem:[#allocation5 + $0x10] sm:$0xff]
        %v219 = vld [vmem:[#allocation5 + $0x18] sm:$0xff]
        %v220 = vld [vmem:[#allocation5 + $0x20] sm:$0xff]
        %v221 = vld [vmem:[#allocation5 + $0x28] sm:$0xff]
        %v222 = vld [vmem:[#allocation5 + $0x30] sm:$0xff]
        %v223 = vld [vmem:[#allocation5 + $0x38] sm:$0xff]
        %v224 = vld [vmem:[#allocation5 + $0x40] sm:$0xff]
        %v225 = vld [vmem:[#allocation5 + $0x48] sm:$0xff]
        %v226 = vld [vmem:[#allocation5 + $0x50] sm:$0xff]
        %v227 = vld [vmem:[#allocation5 + $0x58] sm:$0xff]
        %v228 = vld [vmem:[#allocation5 + $0x60] sm:$0xff]
        %v229 = vld [vmem:[#allocation5 + $0x68] sm:$0xff]
        %v230 = vld [vmem:[#allocation5 + $0x70] sm:$0xff]
        %v231 = vld [vmem:[#allocation5 + $0x78] sm:$0xff]
        %232 = vmatprep.subr.mxu0 0.0
        %v233 = vand.u32 %v216, 4294901760
        %234 = vmatpush1.msra.mxu0 %v233
        %235 = vmatprep.subr.mxu0 0.0
        %v236 = vand.u32 %v217, 4294901760
        %237 = vmatpush1.msra.mxu0 %v236
        %238 = vmatprep.subr.mxu0 0.0
        %v239 = vand.u32 %v218, 4294901760
        %240 = vmatpush1.msra.mxu0 %v239
        %241 = vmatprep.subr.mxu0 0.0
        %v242 = vand.u32 %v219, 4294901760
        %243 = vmatpush1.msra.mxu0 %v242
        %244 = vmatprep.subr.mxu0 0.0
        %v245 = vand.u32 %v220, 4294901760
        %246 = vmatpush1.msra.mxu0 %v245
        %247 = vmatprep.subr.mxu0 0.0
        %v248 = vand.u32 %v221, 4294901760
        %249 = vmatpush1.msra.mxu0 %v248
        %250 = vmatprep.subr.mxu0 0.0
        %v251 = vand.u32 %v222, 4294901760
        %252 = vmatpush1.msra.mxu0 %v251
        %253 = vmatprep.subr.mxu0 0.0
        %v254 = vand.u32 %v223, 4294901760
        %255 = vmatpush1.msra.mxu0 %v254
        %256 = vmatprep.subr.mxu0 0.0
        %v257 = vand.u32 %v224, 4294901760
        %258 = vmatpush1.msra.mxu0 %v257
        %259 = vmatprep.subr.mxu0 0.0
        %v260 = vand.u32 %v225, 4294901760
        %261 = vmatpush1.msra.mxu0 %v260
        %262 = vmatprep.subr.mxu0 0.0
        %v263 = vand.u32 %v226, 4294901760
        %264 = vmatpush1.msra.mxu0 %v263
        %265 = vmatprep.subr.mxu0 0.0
        %v266 = vand.u32 %v227, 4294901760
        %267 = vmatpush1.msra.mxu0 %v266
        %268 = vmatprep.subr.mxu0 0.0
        %v269 = vand.u32 %v228, 4294901760
        %270 = vmatpush1.msra.mxu0 %v269
        %271 = vmatprep.subr.mxu0 0.0
        %v272 = vand.u32 %v229, 4294901760
        %273 = vmatpush1.msra.mxu0 %v272
        %274 = vmatprep.subr.mxu0 0.0
        %v275 = vand.u32 %v230, 4294901760
        %276 = vmatpush1.msra.mxu0 %v275
        %277 = vmatprep.subr.mxu0 0.0
        %v278 = vand.u32 %v231, 4294901760
        %279 = vmatpush1.msra.mxu0 %v278
        %280 = vmatprep.subr.mxu0 0.0
        %281 = vmatpush1.msra.mxu0 0.0
        %282 = vmatprep.subr.mxu0 0.0
        %283 = vmatpush1.msra.mxu0 0.0
        %284 = vmatprep.subr.mxu0 0.0
        %285 = vmatpush1.msra.mxu0 0.0
        %286 = vmatprep.subr.mxu0 0.0
        %287 = vmatpush1.msra.mxu0 0.0
        %288 = vmatprep.subr.mxu0 0.0
        %289 = vmatpush1.msra.mxu0 0.0
        %290 = vmatprep.subr.mxu0 0.0
        %291 = vmatpush1.msra.mxu0 0.0
        %292 = vmatprep.subr.mxu0 0.0
        %293 = vmatpush1.msra.mxu0 0.0
        %294 = vmatprep.subr.mxu0 0.0
        %295 = vmatpush1.msra.mxu0 0.0
        %296 = vmatprep.subr.mxu0 0.0
        %297 = vmatpush1.msra.mxu0 0.0
        %298 = vmatprep.subr.mxu0 0.0
        %299 = vmatpush1.msra.mxu0 0.0
        %300 = vmatprep.subr.mxu0 0.0
        %301 = vmatpush1.msra.mxu0 0.0
        %302 = vmatprep.subr.mxu0 0.0
        %303 = vmatpush1.msra.mxu0 0.0
        %304 = vmatprep.subr.mxu0 0.0
        %305 = vmatpush1.msra.mxu0 0.0
        %306 = vmatprep.subr.mxu0 0.0
        %307 = vmatpush1.msra.mxu0 0.0
        %308 = vmatprep.subr.mxu0 0.0
        %309 = vmatpush1.msra.mxu0 0.0
        %310 = vmatprep.subr.mxu0 0.0
        %311 = vmatpush1.msra.mxu0 0.0
        %312 = vmatprep.mubr.f32.mxu0 0.0
        %v313 = vand.u32 %v215, 4294901760
        %v314 = vsub.f32 %v215, %v313
        %v315 = vand.u32 %v314, 4294901760
        %v316 = vsub.f32 %v314, %v315
        %v317 = vand.u32 %v316, 4294901760
        %318 = vmatmul.mubr.f32.gmra.mrb[0].mxu0 %v317
        %v319 = vpop.f32.mrb[0].mxu0
        %v320 = vadd.f32 0.0, %v319
        %v321 = vpop.f32.mrb[0].mxu0
        %322 = vdwg.mxu0
        %323 = vmatprep.subr.mxu0 0.0
        %v324 = vand.u32 %v216, 4294901760
        %v325 = vsub.f32 %v216, %v324
        %v326 = vand.u32 %v325, 4294901760
        %v327 = vsub.f32 %v325, %v326
        %v328 = vand.u32 %v327, 4294901760
        %329 = vmatpush1.msra.mxu0 %v328
        %330 = vmatprep.subr.mxu0 0.0
        %v331 = vand.u32 %v217, 4294901760
        %v332 = vsub.f32 %v217, %v331
        %v333 = vand.u32 %v332, 4294901760
        %v334 = vsub.f32 %v332, %v333
        %v335 = vand.u32 %v334, 4294901760
        %336 = vmatpush1.msra.mxu0 %v335
        %337 = vmatprep.subr.mxu0 0.0
        %v338 = vand.u32 %v218, 4294901760
        %v339 = vsub.f32 %v218, %v338
        %v340 = vand.u32 %v339, 4294901760
        %v341 = vsub.f32 %v339, %v340
        %v342 = vand.u32 %v341, 4294901760
        %343 = vmatpush1.msra.mxu0 %v342
        %344 = vmatprep.subr.mxu0 0.0
        %v345 = vand.u32 %v219, 4294901760
        %v346 = vsub.f32 %v219, %v345
        %v347 = vand.u32 %v346, 4294901760
        %v348 = vsub.f32 %v346, %v347
        %v349 = vand.u32 %v348, 4294901760
        %350 = vmatpush1.msra.mxu0 %v349
        %351 = vmatprep.subr.mxu0 0.0
        %v352 = vand.u32 %v220, 4294901760
        %v353 = vsub.f32 %v220, %v352
        %v354 = vand.u32 %v353, 4294901760
        %v355 = vsub.f32 %v353, %v354
        %v356 = vand.u32 %v355, 4294901760
        %357 = vmatpush1.msra.mxu0 %v356
        %358 = vmatprep.subr.mxu0 0.0
        %v359 = vand.u32 %v221, 4294901760
        %v360 = vsub.f32 %v221, %v359
        %v361 = vand.u32 %v360, 4294901760
        %v362 = vsub.f32 %v360, %v361
        %v363 = vand.u32 %v362, 4294901760
        %364 = vmatpush1.msra.mxu0 %v363
        %365 = vmatprep.subr.mxu0 0.0
        %v366 = vand.u32 %v222, 4294901760
        %v367 = vsub.f32 %v222, %v366
        %v368 = vand.u32 %v367, 4294901760
        %v369 = vsub.f32 %v367, %v368
        %v370 = vand.u32 %v369, 4294901760
        %371 = vmatpush1.msra.mxu0 %v370
        %372 = vmatprep.subr.mxu0 0.0
        %v373 = vand.u32 %v223, 4294901760
        %v374 = vsub.f32 %v223, %v373
        %v375 = vand.u32 %v374, 4294901760
        %v376 = vsub.f32 %v374, %v375
        %v377 = vand.u32 %v376, 4294901760
        %378 = vmatpush1.msra.mxu0 %v377
        %379 = vmatprep.subr.mxu0 0.0
        %v380 = vand.u32 %v224, 4294901760
        %v381 = vsub.f32 %v224, %v380
        %v382 = vand.u32 %v381, 4294901760
        %v383 = vsub.f32 %v381, %v382
        %v384 = vand.u32 %v383, 4294901760
        %385 = vmatpush1.msra.mxu0 %v384
        %386 = vmatprep.subr.mxu0 0.0
        %v387 = vand.u32 %v225, 4294901760
        %v388 = vsub.f32 %v225, %v387
        %v389 = vand.u32 %v388, 4294901760
        %v390 = vsub.f32 %v388, %v389
        %v391 = vand.u32 %v390, 4294901760
        %392 = vmatpush1.msra.mxu0 %v391
        %393 = vmatprep.subr.mxu0 0.0
        %v394 = vand.u32 %v226, 4294901760
        %v395 = vsub.f32 %v226, %v394
        %v396 = vand.u32 %v395, 4294901760
        %v397 = vsub.f32 %v395, %v396
        %v398 = vand.u32 %v397, 4294901760
        %399 = vmatpush1.msra.mxu0 %v398
        %400 = vmatprep.subr.mxu0 0.0
        %v401 = vand.u32 %v227, 4294901760
        %v402 = vsub.f32 %v227, %v401
        %v403 = vand.u32 %v402, 4294901760
        %v404 = vsub.f32 %v402, %v403
        %v405 = vand.u32 %v404, 4294901760
        %406 = vmatpush1.msra.mxu0 %v405
        %407 = vmatprep.subr.mxu0 0.0
        %v408 = vand.u32 %v228, 4294901760
        %v409 = vsub.f32 %v228, %v408
        %v410 = vand.u32 %v409, 4294901760
        %v411 = vsub.f32 %v409, %v410
        %v412 = vand.u32 %v411, 4294901760
        %413 = vmatpush1.msra.mxu0 %v412
        %414 = vmatprep.subr.mxu0 0.0
        %v415 = vand.u32 %v229, 4294901760
        %v416 = vsub.f32 %v229, %v415
        %v417 = vand.u32 %v416, 4294901760
        %v418 = vsub.f32 %v416, %v417
        %v419 = vand.u32 %v418, 4294901760
        %420 = vmatpush1.msra.mxu0 %v419
        %421 = vmatprep.subr.mxu0 0.0
        %v422 = vand.u32 %v230, 4294901760
        %v423 = vsub.f32 %v230, %v422
        %v424 = vand.u32 %v423, 4294901760
        %v425 = vsub.f32 %v423, %v424
        %v426 = vand.u32 %v425, 4294901760
        %427 = vmatpush1.msra.mxu0 %v426
        %428 = vmatprep.subr.mxu0 0.0
        %v429 = vand.u32 %v231, 4294901760
        %v430 = vsub.f32 %v231, %v429
        %v431 = vand.u32 %v430, 4294901760
        %v432 = vsub.f32 %v430, %v431
        %v433 = vand.u32 %v432, 4294901760
        %434 = vmatpush1.msra.mxu0 %v433
        %435 = vmatprep.subr.mxu0 0.0
        %436 = vmatpush1.msra.mxu0 0.0
        %437 = vmatprep.subr.mxu0 0.0
        %438 = vmatpush1.msra.mxu0 0.0
        %439 = vmatprep.subr.mxu0 0.0
        %440 = vmatpush1.msra.mxu0 0.0
        %441 = vmatprep.subr.mxu0 0.0
        %442 = vmatpush1.msra.mxu0 0.0
        %443 = vmatprep.subr.mxu0 0.0
        %444 = vmatpush1.msra.mxu0 0.0
        %445 = vmatprep.subr.mxu0 0.0
        %446 = vmatpush1.msra.mxu0 0.0
        %447 = vmatprep.subr.mxu0 0.0
        %448 = vmatpush1.msra.mxu0 0.0
        %449 = vmatprep.subr.mxu0 0.0
        %450 = vmatpush1.msra.mxu0 0.0
        %451 = vmatprep.subr.mxu0 0.0
        %452 = vmatpush1.msra.mxu0 0.0
        %453 = vmatprep.subr.mxu0 0.0
        %454 = vmatpush1.msra.mxu0 0.0
        %455 = vmatprep.subr.mxu0 0.0
        %456 = vmatpush1.msra.mxu0 0.0
        %457 = vmatprep.subr.mxu0 0.0
        %458 = vmatpush1.msra.mxu0 0.0
        %459 = vmatprep.subr.mxu0 0.0
        %460 = vmatpush1.msra.mxu0 0.0
        %461 = vmatprep.subr.mxu0 0.0
        %462 = vmatpush1.msra.mxu0 0.0
        %463 = vmatprep.subr.mxu0 0.0
        %464 = vmatpush1.msra.mxu0 0.0
        %465 = vmatprep.subr.mxu0 0.0
        %466 = vmatpush1.msra.mxu0 0.0
        %467 = vmatprep.mubr.f32.mxu0 0.0
        %v468 = vand.u32 %v215, 4294901760
        %469 = vmatmul.mubr.f32.gmra.mrb[0].mxu0 %v468
        %v470 = vpop.f32.mrb[0].mxu0
        %v471 = vadd.f32 %v320, %v470
        %v472 = vpop.f32.mrb[0].mxu0
        %473 = vdwg.mxu0
        %474 = vmatprep.subr.mxu0 0.0
        %v475 = vand.u32 %v216, 4294901760
        %v476 = vsub.f32 %v216, %v475
        %477 = vmatpush1.msra.mxu0 %v476
        %478 = vmatprep.subr.mxu0 0.0
        %v479 = vand.u32 %v217, 4294901760
        %v480 = vsub.f32 %v217, %v479
        %481 = vmatpush1.msra.mxu0 %v480
        %482 = vmatprep.subr.mxu0 0.0
        %v483 = vand.u32 %v218, 4294901760
        %v484 = vsub.f32 %v218, %v483
        %485 = vmatpush1.msra.mxu0 %v484
        %486 = vmatprep.subr.mxu0 0.0
        %v487 = vand.u32 %v219, 4294901760
        %v488 = vsub.f32 %v219, %v487
        %489 = vmatpush1.msra.mxu0 %v488
        %490 = vmatprep.subr.mxu0 0.0
        %v491 = vand.u32 %v220, 4294901760
        %v492 = vsub.f32 %v220, %v491
        %493 = vmatpush1.msra.mxu0 %v492
        %494 = vmatprep.subr.mxu0 0.0
        %v495 = vand.u32 %v221, 4294901760
        %v496 = vsub.f32 %v221, %v495
        %497 = vmatpush1.msra.mxu0 %v496
        %498 = vmatprep.subr.mxu0 0.0
        %v499 = vand.u32 %v222, 4294901760
        %v500 = vsub.f32 %v222, %v499
        %501 = vmatpush1.msra.mxu0 %v500
        %502 = vmatprep.subr.mxu0 0.0
        %v503 = vand.u32 %v223, 4294901760
        %v504 = vsub.f32 %v223, %v503
        %505 = vmatpush1.msra.mxu0 %v504
        %506 = vmatprep.subr.mxu0 0.0
        %v507 = vand.u32 %v224, 4294901760
        %v508 = vsub.f32 %v224, %v507
        %509 = vmatpush1.msra.mxu0 %v508
        %510 = vmatprep.subr.mxu0 0.0
        %v511 = vand.u32 %v225, 4294901760
        %v512 = vsub.f32 %v225, %v511
        %513 = vmatpush1.msra.mxu0 %v512
        %514 = vmatprep.subr.mxu0 0.0
        %v515 = vand.u32 %v226, 4294901760
        %v516 = vsub.f32 %v226, %v515
        %517 = vmatpush1.msra.mxu0 %v516
        %518 = vmatprep.subr.mxu0 0.0
        %v519 = vand.u32 %v227, 4294901760
        %v520 = vsub.f32 %v227, %v519
        %521 = vmatpush1.msra.mxu0 %v520
        %522 = vmatprep.subr.mxu0 0.0
        %v523 = vand.u32 %v228, 4294901760
        %v524 = vsub.f32 %v228, %v523
        %525 = vmatpush1.msra.mxu0 %v524
        %526 = vmatprep.subr.mxu0 0.0
        %v527 = vand.u32 %v229, 4294901760
        %v528 = vsub.f32 %v229, %v527
        %529 = vmatpush1.msra.mxu0 %v528
        %530 = vmatprep.subr.mxu0 0.0
        %v531 = vand.u32 %v230, 4294901760
        %v532 = vsub.f32 %v230, %v531
        %533 = vmatpush1.msra.mxu0 %v532
        %534 = vmatprep.subr.mxu0 0.0
        %v535 = vand.u32 %v231, 4294901760
        %v536 = vsub.f32 %v231, %v535
        %537 = vmatpush1.msra.mxu0 %v536
        %538 = vmatprep.subr.mxu0 0.0
        %539 = vmatpush1.msra.mxu0 0.0
        %540 = vmatprep.subr.mxu0 0.0
        %541 = vmatpush1.msra.mxu0 0.0
        %542 = vmatprep.subr.mxu0 0.0
        %543 = vmatpush1.msra.mxu0 0.0
        %544 = vmatprep.subr.mxu0 0.0
        %545 = vmatpush1.msra.mxu0 0.0
        %546 = vmatprep.subr.mxu0 0.0
        %547 = vmatpush1.msra.mxu0 0.0
        %548 = vmatprep.subr.mxu0 0.0
        %549 = vmatpush1.msra.mxu0 0.0
        %550 = vmatprep.subr.mxu0 0.0
        %551 = vmatpush1.msra.mxu0 0.0
        %552 = vmatprep.subr.mxu0 0.0
        %553 = vmatpush1.msra.mxu0 0.0
        %554 = vmatprep.subr.mxu0 0.0
        %555 = vmatpush1.msra.mxu0 0.0
        %556 = vmatprep.subr.mxu0 0.0
        %557 = vmatpush1.msra.mxu0 0.0
        %558 = vmatprep.subr.mxu0 0.0
        %559 = vmatpush1.msra.mxu0 0.0
        %560 = vmatprep.subr.mxu0 0.0
        %561 = vmatpush1.msra.mxu0 0.0
        %562 = vmatprep.subr.mxu0 0.0
        %563 = vmatpush1.msra.mxu0 0.0
        %564 = vmatprep.subr.mxu0 0.0
        %565 = vmatpush1.msra.mxu0 0.0
        %566 = vmatprep.subr.mxu0 0.0
        %567 = vmatpush1.msra.mxu0 0.0
        %568 = vmatprep.subr.mxu0 0.0
        %569 = vmatpush1.msra.mxu0 0.0
        %570 = vmatprep.mubr.f32.mxu0 0.0
        %v571 = vand.u32 %v215, 4294901760
        %v572 = vsub.f32 %v215, %v571
        %573 = vmatmul.mubr.f32.gmra.mrb[0].mxu0 %v572
        %v574 = vpop.f32.mrb[0].mxu0
        %v575 = vadd.f32 %v471, %v574
        %v576 = vpop.f32.mrb[0].mxu0
        %577 = vdwg.mxu0
        %578 = vmatprep.subr.mxu0 0.0
        %v579 = vand.u32 %v216, 4294901760
        %580 = vmatpush1.msra.mxu0 %v579
        %581 = vmatprep.subr.mxu0 0.0
        %v582 = vand.u32 %v217, 4294901760
        %583 = vmatpush1.msra.mxu0 %v582
        %584 = vmatprep.subr.mxu0 0.0
        %v585 = vand.u32 %v218, 4294901760
        %586 = vmatpush1.msra.mxu0 %v585
        %587 = vmatprep.subr.mxu0 0.0
        %v588 = vand.u32 %v219, 4294901760
        %589 = vmatpush1.msra.mxu0 %v588
        %590 = vmatprep.subr.mxu0 0.0
        %v591 = vand.u32 %v220, 4294901760
        %592 = vmatpush1.msra.mxu0 %v591
        %593 = vmatprep.subr.mxu0 0.0
        %v594 = vand.u32 %v221, 4294901760
        %595 = vmatpush1.msra.mxu0 %v594
        %596 = vmatprep.subr.mxu0 0.0
        %v597 = vand.u32 %v222, 4294901760
        %598 = vmatpush1.msra.mxu0 %v597
        %599 = vmatprep.subr.mxu0 0.0
        %v600 = vand.u32 %v223, 4294901760
        %601 = vmatpush1.msra.mxu0 %v600
        %602 = vmatprep.subr.mxu0 0.0
        %v603 = vand.u32 %v224, 4294901760
        %604 = vmatpush1.msra.mxu0 %v603
        %605 = vmatprep.subr.mxu0 0.0
        %v606 = vand.u32 %v225, 4294901760
        %607 = vmatpush1.msra.mxu0 %v606
        %608 = vmatprep.subr.mxu0 0.0
        %v609 = vand.u32 %v226, 4294901760
        %610 = vmatpush1.msra.mxu0 %v609
        %611 = vmatprep.subr.mxu0 0.0
        %v612 = vand.u32 %v227, 4294901760
        %613 = vmatpush1.msra.mxu0 %v612
        %614 = vmatprep.subr.mxu0 0.0
        %v615 = vand.u32 %v228, 4294901760
        %616 = vmatpush1.msra.mxu0 %v615
        %617 = vmatprep.subr.mxu0 0.0
        %v618 = vand.u32 %v229, 4294901760
        %619 = vmatpush1.msra.mxu0 %v618
        %620 = vmatprep.subr.mxu0 0.0
        %v621 = vand.u32 %v230, 4294901760
        %622 = vmatpush1.msra.mxu0 %v621
        %623 = vmatprep.subr.mxu0 0.0
        %v624 = vand.u32 %v231, 4294901760
        %625 = vmatpush1.msra.mxu0 %v624
        %626 = vmatprep.subr.mxu0 0.0
        %627 = vmatpush1.msra.mxu0 0.0
        %628 = vmatprep.subr.mxu0 0.0
        %629 = vmatpush1.msra.mxu0 0.0
        %630 = vmatprep.subr.mxu0 0.0
        %631 = vmatpush1.msra.mxu0 0.0
        %632 = vmatprep.subr.mxu0 0.0
        %633 = vmatpush1.msra.mxu0 0.0
        %634 = vmatprep.subr.mxu0 0.0
        %635 = vmatpush1.msra.mxu0 0.0
        %636 = vmatprep.subr.mxu0 0.0
        %637 = vmatpush1.msra.mxu0 0.0
        %638 = vmatprep.subr.mxu0 0.0
        %639 = vmatpush1.msra.mxu0 0.0
        %640 = vmatprep.subr.mxu0 0.0
        %641 = vmatpush1.msra.mxu0 0.0
        %642 = vmatprep.subr.mxu0 0.0
        %643 = vmatpush1.msra.mxu0 0.0
        %644 = vmatprep.subr.mxu0 0.0
        %645 = vmatpush1.msra.mxu0 0.0
        %646 = vmatprep.subr.mxu0 0.0
        %647 = vmatpush1.msra.mxu0 0.0
        %648 = vmatprep.subr.mxu0 0.0
        %649 = vmatpush1.msra.mxu0 0.0
        %650 = vmatprep.subr.mxu0 0.0
        %651 = vmatpush1.msra.mxu0 0.0
        %652 = vmatprep.subr.mxu0 0.0
        %653 = vmatpush1.msra.mxu0 0.0
        %654 = vmatprep.subr.mxu0 0.0
        %655 = vmatpush1.msra.mxu0 0.0
        %656 = vmatprep.subr.mxu0 0.0
        %657 = vmatpush1.msra.mxu0 0.0
        %658 = vmatprep.mubr.f32.mxu0 0.0
        %v659 = vand.u32 %v215, 4294901760
        %v660 = vsub.f32 %v215, %v659
        %v661 = vand.u32 %v660, 4294901760
        %662 = vmatmul.mubr.f32.gmra.mrb[0].mxu0 %v661
        %v663 = vpop.f32.mrb[0].mxu0
        %v664 = vadd.f32 %v575, %v663
        %v665 = vpop.f32.mrb[0].mxu0
        %666 = vdwg.mxu0
        %667 = vmatprep.subr.mxu0 0.0
        %v668 = vand.u32 %v216, 4294901760
        %v669 = vsub.f32 %v216, %v668
        %v670 = vand.u32 %v669, 4294901760
        %671 = vmatpush1.msra.mxu0 %v670
        %672 = vmatprep.subr.mxu0 0.0
        %v673 = vand.u32 %v217, 4294901760
        %v674 = vsub.f32 %v217, %v673
        %v675 = vand.u32 %v674, 4294901760
        %676 = vmatpush1.msra.mxu0 %v675
        %677 = vmatprep.subr.mxu0 0.0
        %v678 = vand.u32 %v218, 4294901760
        %v679 = vsub.f32 %v218, %v678
        %v680 = vand.u32 %v679, 4294901760
        %681 = vmatpush1.msra.mxu0 %v680
        %682 = vmatprep.subr.mxu0 0.0
        %v683 = vand.u32 %v219, 4294901760
        %v684 = vsub.f32 %v219, %v683
        %v685 = vand.u32 %v684, 4294901760
        %686 = vmatpush1.msra.mxu0 %v685
        %687 = vmatprep.subr.mxu0 0.0
        %v688 = vand.u32 %v220, 4294901760
        %v689 = vsub.f32 %v220, %v688
        %v690 = vand.u32 %v689, 4294901760
        %691 = vmatpush1.msra.mxu0 %v690
        %692 = vmatprep.subr.mxu0 0.0
        %v693 = vand.u32 %v221, 4294901760
        %v694 = vsub.f32 %v221, %v693
        %v695 = vand.u32 %v694, 4294901760
        %696 = vmatpush1.msra.mxu0 %v695
        %697 = vmatprep.subr.mxu0 0.0
        %v698 = vand.u32 %v222, 4294901760
        %v699 = vsub.f32 %v222, %v698
        %v700 = vand.u32 %v699, 4294901760
        %701 = vmatpush1.msra.mxu0 %v700
        %702 = vmatprep.subr.mxu0 0.0
        %v703 = vand.u32 %v223, 4294901760
        %v704 = vsub.f32 %v223, %v703
        %v705 = vand.u32 %v704, 4294901760
        %706 = vmatpush1.msra.mxu0 %v705
        %707 = vmatprep.subr.mxu0 0.0
        %v708 = vand.u32 %v224, 4294901760
        %v709 = vsub.f32 %v224, %v708
        %v710 = vand.u32 %v709, 4294901760
        %711 = vmatpush1.msra.mxu0 %v710
        %712 = vmatprep.subr.mxu0 0.0
        %v713 = vand.u32 %v225, 4294901760
        %v714 = vsub.f32 %v225, %v713
        %v715 = vand.u32 %v714, 4294901760
        %716 = vmatpush1.msra.mxu0 %v715
        %717 = vmatprep.subr.mxu0 0.0
        %v718 = vand.u32 %v226, 4294901760
        %v719 = vsub.f32 %v226, %v718
        %v720 = vand.u32 %v719, 4294901760
        %721 = vmatpush1.msra.mxu0 %v720
        %722 = vmatprep.subr.mxu0 0.0
        %v723 = vand.u32 %v227, 4294901760
        %v724 = vsub.f32 %v227, %v723
        %v725 = vand.u32 %v724, 4294901760
        %726 = vmatpush1.msra.mxu0 %v725
        %727 = vmatprep.subr.mxu0 0.0
        %v728 = vand.u32 %v228, 4294901760
        %v729 = vsub.f32 %v228, %v728
        %v730 = vand.u32 %v729, 4294901760
        %731 = vmatpush1.msra.mxu0 %v730
        %732 = vmatprep.subr.mxu0 0.0
        %v733 = vand.u32 %v229, 4294901760
        %v734 = vsub.f32 %v229, %v733
        %v735 = vand.u32 %v734, 4294901760
        %736 = vmatpush1.msra.mxu0 %v735
        %737 = vmatprep.subr.mxu0 0.0
        %v738 = vand.u32 %v230, 4294901760
        %v739 = vsub.f32 %v230, %v738
        %v740 = vand.u32 %v739, 4294901760
        %741 = vmatpush1.msra.mxu0 %v740
        %742 = vmatprep.subr.mxu0 0.0
        %v743 = vand.u32 %v231, 4294901760
        %v744 = vsub.f32 %v231, %v743
        %v745 = vand.u32 %v744, 4294901760
        %746 = vmatpush1.msra.mxu0 %v745
        %747 = vmatprep.subr.mxu0 0.0
        %748 = vmatpush1.msra.mxu0 0.0
        %749 = vmatprep.subr.mxu0 0.0
        %750 = vmatpush1.msra.mxu0 0.0
        %751 = vmatprep.subr.mxu0 0.0
        %752 = vmatpush1.msra.mxu0 0.0
        %753 = vmatprep.subr.mxu0 0.0
        %754 = vmatpush1.msra.mxu0 0.0
        %755 = vmatprep.subr.mxu0 0.0
        %756 = vmatpush1.msra.mxu0 0.0
        %757 = vmatprep.subr.mxu0 0.0
        %758 = vmatpush1.msra.mxu0 0.0
        %759 = vmatprep.subr.mxu0 0.0
        %760 = vmatpush1.msra.mxu0 0.0
        %761 = vmatprep.subr.mxu0 0.0
        %762 = vmatpush1.msra.mxu0 0.0
        %763 = vmatprep.subr.mxu0 0.0
        %764 = vmatpush1.msra.mxu0 0.0
        %765 = vmatprep.subr.mxu0 0.0
        %766 = vmatpush1.msra.mxu0 0.0
        %767 = vmatprep.subr.mxu0 0.0
        %768 = vmatpush1.msra.mxu0 0.0
        %769 = vmatprep.subr.mxu0 0.0
        %770 = vmatpush1.msra.mxu0 0.0
        %771 = vmatprep.subr.mxu0 0.0
        %772 = vmatpush1.msra.mxu0 0.0
        %773 = vmatprep.subr.mxu0 0.0
        %774 = vmatpush1.msra.mxu0 0.0
        %775 = vmatprep.subr.mxu0 0.0
        %776 = vmatpush1.msra.mxu0 0.0
        %777 = vmatprep.subr.mxu0 0.0
        %778 = vmatpush1.msra.mxu0 0.0
        %779 = vmatprep.mubr.f32.mxu0 0.0
        %v780 = vand.u32 %v215, 4294901760
        %781 = vmatmul.mubr.f32.gmra.mrb[0].mxu0 %v780
        %v782 = vpop.f32.mrb[0].mxu0
        %v783 = vadd.f32 %v664, %v782
        %v784 = vpop.f32.mrb[0].mxu0
        %785 = vdwg.mxu0
        %786 = vmatprep.subr.mxu0 0.0
        %v787 = vand.u32 %v216, 4294901760
        %788 = vmatpush1.msra.mxu0 %v787
        %789 = vmatprep.subr.mxu0 0.0
        %v790 = vand.u32 %v217, 4294901760
        %791 = vmatpush1.msra.mxu0 %v790
        %792 = vmatprep.subr.mxu0 0.0
        %v793 = vand.u32 %v218, 4294901760
        %794 = vmatpush1.msra.mxu0 %v793
        %795 = vmatprep.subr.mxu0 0.0
        %v796 = vand.u32 %v219, 4294901760
        %797 = vmatpush1.msra.mxu0 %v796
        %798 = vmatprep.subr.mxu0 0.0
        %v799 = vand.u32 %v220, 4294901760
        %800 = vmatpush1.msra.mxu0 %v799
        %801 = vmatprep.subr.mxu0 0.0
        %v802 = vand.u32 %v221, 4294901760
        %803 = vmatpush1.msra.mxu0 %v802
        %804 = vmatprep.subr.mxu0 0.0
        %v805 = vand.u32 %v222, 4294901760
        %806 = vmatpush1.msra.mxu0 %v805
        %807 = vmatprep.subr.mxu0 0.0
        %v808 = vand.u32 %v223, 4294901760
        %809 = vmatpush1.msra.mxu0 %v808
        %810 = vmatprep.subr.mxu0 0.0
        %v811 = vand.u32 %v224, 4294901760
        %812 = vmatpush1.msra.mxu0 %v811
        %813 = vmatprep.subr.mxu0 0.0
        %v814 = vand.u32 %v225, 4294901760
        %815 = vmatpush1.msra.mxu0 %v814
        %816 = vmatprep.subr.mxu0 0.0
        %v817 = vand.u32 %v226, 4294901760
        %818 = vmatpush1.msra.mxu0 %v817
        %819 = vmatprep.subr.mxu0 0.0
        %v820 = vand.u32 %v227, 4294901760
        %821 = vmatpush1.msra.mxu0 %v820
        %822 = vmatprep.subr.mxu0 0.0
        %v823 = vand.u32 %v228, 4294901760
        %824 = vmatpush1.msra.mxu0 %v823
        %825 = vmatprep.subr.mxu0 0.0
        %v826 = vand.u32 %v229, 4294901760
        %827 = vmatpush1.msra.mxu0 %v826
        %828 = vmatprep.subr.mxu0 0.0
        %v829 = vand.u32 %v230, 4294901760
        %830 = vmatpush1.msra.mxu0 %v829
        %831 = vmatprep.subr.mxu0 0.0
        %v832 = vand.u32 %v231, 4294901760
        %833 = vmatpush1.msra.mxu0 %v832
        %834 = vmatprep.subr.mxu0 0.0
        %835 = vmatpush1.msra.mxu0 0.0
        %836 = vmatprep.subr.mxu0 0.0
        %837 = vmatpush1.msra.mxu0 0.0
        %838 = vmatprep.subr.mxu0 0.0
        %839 = vmatpush1.msra.mxu0 0.0
        %840 = vmatprep.subr.mxu0 0.0
        %841 = vmatpush1.msra.mxu0 0.0
        %842 = vmatprep.subr.mxu0 0.0
        %843 = vmatpush1.msra.mxu0 0.0
        %844 = vmatprep.subr.mxu0 0.0
        %845 = vmatpush1.msra.mxu0 0.0
        %846 = vmatprep.subr.mxu0 0.0
        %847 = vmatpush1.msra.mxu0 0.0
        %848 = vmatprep.subr.mxu0 0.0
        %849 = vmatpush1.msra.mxu0 0.0
        %850 = vmatprep.subr.mxu0 0.0
        %851 = vmatpush1.msra.mxu0 0.0
        %852 = vmatprep.subr.mxu0 0.0
        %853 = vmatpush1.msra.mxu0 0.0
        %854 = vmatprep.subr.mxu0 0.0
        %855 = vmatpush1.msra.mxu0 0.0
        %856 = vmatprep.subr.mxu0 0.0
        %857 = vmatpush1.msra.mxu0 0.0
        %858 = vmatprep.subr.mxu0 0.0
        %859 = vmatpush1.msra.mxu0 0.0
        %860 = vmatprep.subr.mxu0 0.0
        %861 = vmatpush1.msra.mxu0 0.0
        %862 = vmatprep.subr.mxu0 0.0
        %863 = vmatpush1.msra.mxu0 0.0
        %864 = vmatprep.subr.mxu0 0.0
        %865 = vmatpush1.msra.mxu0 0.0
        %866 = vmatprep.mubr.f32.mxu0 0.0
        %v867 = vand.u32 %v215, 4294901760
        %868 = vmatmul.mubr.f32.gmra.mrb[0].mxu0 %v867
        %v869 = vpop.f32.mrb[0].mxu0
        %v870 = vadd.f32 %v783, %v869
        %v871 = vpop.f32.mrb[0].mxu0
        %872 = vdwg.mxu0
        %v873 = vmax.f32 %v870, 0.0
        %v874 = vld [vmem:[#allocation7] sm:$0xff]
        %v875 = vld [vmem:[#allocation7 + $0x8] sm:$0xff]
        %v876 = vld [vmem:[#allocation7 + $0x10] sm:$0xff]
        %v877 = vld [vmem:[#allocation7 + $0x18] sm:$0xff]
        %v878 = vld [vmem:[#allocation7 + $0x20] sm:$0xff]
        %v879 = vld [vmem:[#allocation7 + $0x28] sm:$0xff]
        %v880 = vld [vmem:[#allocation7 + $0x30] sm:$0xff]
        %v881 = vld [vmem:[#allocation7 + $0x38] sm:$0xff]
        %v882 = vld [vmem:[#allocation7 + $0x40] sm:$0xff]
        %v883 = vld [vmem:[#allocation7 + $0x48] sm:$0xff]
        %v884 = vld [vmem:[#allocation7 + $0x50] sm:$0xff]
        %v885 = vld [vmem:[#allocation7 + $0x58] sm:$0xff]
        %v886 = vld [vmem:[#allocation7 + $0x60] sm:$0xff]
        %v887 = vld [vmem:[#allocation7 + $0x68] sm:$0xff]
        %v888 = vld [vmem:[#allocation7 + $0x70] sm:$0xff]
        %v889 = vld [vmem:[#allocation7 + $0x78] sm:$0xff]
        %890 = vmatprep.subr.mxu0 0.0
        %v891 = vand.u32 %v874, 4294901760
        %892 = vmatpush1.msra.mxu0 %v891
        %893 = vmatprep.subr.mxu0 0.0
        %v894 = vand.u32 %v875, 4294901760
        %895 = vmatpush1.msra.mxu0 %v894
        %896 = vmatprep.subr.mxu0 0.0
        %v897 = vand.u32 %v876, 4294901760
        %898 = vmatpush1.msra.mxu0 %v897
        %899 = vmatprep.subr.mxu0 0.0
        %v900 = vand.u32 %v877, 4294901760
        %901 = vmatpush1.msra.mxu0 %v900
        %902 = vmatprep.subr.mxu0 0.0
        %v903 = vand.u32 %v878, 4294901760
        %904 = vmatpush1.msra.mxu0 %v903
        %905 = vmatprep.subr.mxu0 0.0
        %v906 = vand.u32 %v879, 4294901760
        %907 = vmatpush1.msra.mxu0 %v906
        %908 = vmatprep.subr.mxu0 0.0
        %v909 = vand.u32 %v880, 4294901760
        %910 = vmatpush1.msra.mxu0 %v909
        %911 = vmatprep.subr.mxu0 0.0
        %v912 = vand.u32 %v881, 4294901760
        %913 = vmatpush1.msra.mxu0 %v912
        %914 = vmatprep.subr.mxu0 0.0
        %v915 = vand.u32 %v882, 4294901760
        %916 = vmatpush1.msra.mxu0 %v915
        %917 = vmatprep.subr.mxu0 0.0
        %v918 = vand.u32 %v883, 4294901760
        %919 = vmatpush1.msra.mxu0 %v918
        %920 = vmatprep.subr.mxu0 0.0
        %v921 = vand.u32 %v884, 4294901760
        %922 = vmatpush1.msra.mxu0 %v921
        %923 = vmatprep.subr.mxu0 0.0
        %v924 = vand.u32 %v885, 4294901760
        %925 = vmatpush1.msra.mxu0 %v924
        %926 = vmatprep.subr.mxu0 0.0
        %v927 = vand.u32 %v886, 4294901760
        %928 = vmatpush1.msra.mxu0 %v927
        %929 = vmatprep.subr.mxu0 0.0
        %v930 = vand.u32 %v887, 4294901760
        %931 = vmatpush1.msra.mxu0 %v930
        %932 = vmatprep.subr.mxu0 0.0
        %v933 = vand.u32 %v888, 4294901760
        %934 = vmatpush1.msra.mxu0 %v933
        %935 = vmatprep.subr.mxu0 0.0
        %v936 = vand.u32 %v889, 4294901760
        %937 = vmatpush1.msra.mxu0 %v936
        %938 = vmatprep.subr.mxu0 0.0
        %939 = vmatpush1.msra.mxu0 0.0
        %940 = vmatprep.subr.mxu0 0.0
        %941 = vmatpush1.msra.mxu0 0.0
        %942 = vmatprep.subr.mxu0 0.0
        %943 = vmatpush1.msra.mxu0 0.0
        %944 = vmatprep.subr.mxu0 0.0
        %945 = vmatpush1.msra.mxu0 0.0
        %946 = vmatprep.subr.mxu0 0.0
        %947 = vmatpush1.msra.mxu0 0.0
        %948 = vmatprep.subr.mxu0 0.0
        %949 = vmatpush1.msra.mxu0 0.0
        %950 = vmatprep.subr.mxu0 0.0
        %951 = vmatpush1.msra.mxu0 0.0
        %952 = vmatprep.subr.mxu0 0.0
        %953 = vmatpush1.msra.mxu0 0.0
        %954 = vmatprep.subr.mxu0 0.0
        %955 = vmatpush1.msra.mxu0 0.0
        %956 = vmatprep.subr.mxu0 0.0
        %957 = vmatpush1.msra.mxu0 0.0
        %958 = vmatprep.subr.mxu0 0.0
        %959 = vmatpush1.msra.mxu0 0.0
        %960 = vmatprep.subr.mxu0 0.0
        %961 = vmatpush1.msra.mxu0 0.0
        %962 = vmatprep.subr.mxu0 0.0
        %963 = vmatpush1.msra.mxu0 0.0
        %964 = vmatprep.subr.mxu0 0.0
        %965 = vmatpush1.msra.mxu0 0.0
        %966 = vmatprep.subr.mxu0 0.0
        %967 = vmatpush1.msra.mxu0 0.0
        %968 = vmatprep.subr.mxu0 0.0
        %969 = vmatpush1.msra.mxu0 0.0
        %970 = vmatprep.mubr.f32.mxu0 0.0
        %v971 = vand.u32 %v873, 4294901760
        %v972 = vsub.f32 %v873, %v971
        %v973 = vand.u32 %v972, 4294901760
        %v974 = vsub.f32 %v972, %v973
        %v975 = vand.u32 %v974, 4294901760
        %976 = vmatmul.mubr.f32.gmra.mrb[0].mxu0 %v975
        %v977 = vpop.f32.mrb[0].mxu0
        %v978 = vadd.f32 0.0, %v977
        %v979 = vpop.f32.mrb[0].mxu0
        %980 = vdwg.mxu0
        %981 = vmatprep.subr.mxu0 0.0
        %v982 = vand.u32 %v874, 4294901760
        %v983 = vsub.f32 %v874, %v982
        %v984 = vand.u32 %v983, 4294901760
        %v985 = vsub.f32 %v983, %v984
        %v986 = vand.u32 %v985, 4294901760
        %987 = vmatpush1.msra.mxu0 %v986
        %988 = vmatprep.subr.mxu0 0.0
        %v989 = vand.u32 %v875, 4294901760
        %v990 = vsub.f32 %v875, %v989
        %v991 = vand.u32 %v990, 4294901760
        %v992 = vsub.f32 %v990, %v991
        %v993 = vand.u32 %v992, 4294901760
        %994 = vmatpush1.msra.mxu0 %v993
        %995 = vmatprep.subr.mxu0 0.0
        %v996 = vand.u32 %v876, 4294901760
        %v997 = vsub.f32 %v876, %v996
        %v998 = vand.u32 %v997, 4294901760
        %v999 = vsub.f32 %v997, %v998
        %v1000 = vand.u32 %v999, 4294901760
        %1001 = vmatpush1.msra.mxu0 %v1000
        %1002 = vmatprep.subr.mxu0 0.0
        %v1003 = vand.u32 %v877, 4294901760
        %v1004 = vsub.f32 %v877, %v1003
        %v1005 = vand.u32 %v1004, 4294901760
        %v1006 = vsub.f32 %v1004, %v1005
        %v1007 = vand.u32 %v1006, 4294901760
        %1008 = vmatpush1.msra.mxu0 %v1007
        %1009 = vmatprep.subr.mxu0 0.0
        %v1010 = vand.u32 %v878, 4294901760
        %v1011 = vsub.f32 %v878, %v1010
        %v1012 = vand.u32 %v1011, 4294901760
        %v1013 = vsub.f32 %v1011, %v1012
        %v1014 = vand.u32 %v1013, 4294901760
        %1015 = vmatpush1.msra.mxu0 %v1014
        %1016 = vmatprep.subr.mxu0 0.0
        %v1017 = vand.u32 %v879, 4294901760
        %v1018 = vsub.f32 %v879, %v1017
        %v1019 = vand.u32 %v1018, 4294901760
        %v1020 = vsub.f32 %v1018, %v1019
        %v1021 = vand.u32 %v1020, 4294901760
        %1022 = vmatpush1.msra.mxu0 %v1021
        %1023 = vmatprep.subr.mxu0 0.0
        %v1024 = vand.u32 %v880, 4294901760
        %v1025 = vsub.f32 %v880, %v1024
        %v1026 = vand.u32 %v1025, 4294901760
        %v1027 = vsub.f32 %v1025, %v1026
        %v1028 = vand.u32 %v1027, 4294901760
        %1029 = vmatpush1.msra.mxu0 %v1028
        %1030 = vmatprep.subr.mxu0 0.0
        %v1031 = vand.u32 %v881, 4294901760
        %v1032 = vsub.f32 %v881, %v1031
        %v1033 = vand.u32 %v1032, 4294901760
        %v1034 = vsub.f32 %v1032, %v1033
        %v1035 = vand.u32 %v1034, 4294901760
        %1036 = vmatpush1.msra.mxu0 %v1035
        %1037 = vmatprep.subr.mxu0 0.0
        %v1038 = vand.u32 %v882, 4294901760
        %v1039 = vsub.f32 %v882, %v1038
        %v1040 = vand.u32 %v1039, 4294901760
        %v1041 = vsub.f32 %v1039, %v1040
        %v1042 = vand.u32 %v1041, 4294901760
        %1043 = vmatpush1.msra.mxu0 %v1042
        %1044 = vmatprep.subr.mxu0 0.0
        %v1045 = vand.u32 %v883, 4294901760
        %v1046 = vsub.f32 %v883, %v1045
        %v1047 = vand.u32 %v1046, 4294901760
        %v1048 = vsub.f32 %v1046, %v1047
        %v1049 = vand.u32 %v1048, 4294901760
        %1050 = vmatpush1.msra.mxu0 %v1049
        %1051 = vmatprep.subr.mxu0 0.0
        %v1052 = vand.u32 %v884, 4294901760
        %v1053 = vsub.f32 %v884, %v1052
        %v1054 = vand.u32 %v1053, 4294901760
        %v1055 = vsub.f32 %v1053, %v1054
        %v1056 = vand.u32 %v1055, 4294901760
        %1057 = vmatpush1.msra.mxu0 %v1056
        %1058 = vmatprep.subr.mxu0 0.0
        %v1059 = vand.u32 %v885, 4294901760
        %v1060 = vsub.f32 %v885, %v1059
        %v1061 = vand.u32 %v1060, 4294901760
        %v1062 = vsub.f32 %v1060, %v1061
        %v1063 = vand.u32 %v1062, 4294901760
        %1064 = vmatpush1.msra.mxu0 %v1063
        %1065 = vmatprep.subr.mxu0 0.0
        %v1066 = vand.u32 %v886, 4294901760
        %v1067 = vsub.f32 %v886, %v1066
        %v1068 = vand.u32 %v1067, 4294901760
        %v1069 = vsub.f32 %v1067, %v1068
        %v1070 = vand.u32 %v1069, 4294901760
        %1071 = vmatpush1.msra.mxu0 %v1070
        %1072 = vmatprep.subr.mxu0 0.0
        %v1073 = vand.u32 %v887, 4294901760
        %v1074 = vsub.f32 %v887, %v1073
        %v1075 = vand.u32 %v1074, 4294901760
        %v1076 = vsub.f32 %v1074, %v1075
        %v1077 = vand.u32 %v1076, 4294901760
        %1078 = vmatpush1.msra.mxu0 %v1077
        %1079 = vmatprep.subr.mxu0 0.0
        %v1080 = vand.u32 %v888, 4294901760
        %v1081 = vsub.f32 %v888, %v1080
        %v1082 = vand.u32 %v1081, 4294901760
        %v1083 = vsub.f32 %v1081, %v1082
        %v1084 = vand.u32 %v1083, 4294901760
        %1085 = vmatpush1.msra.mxu0 %v1084
        %1086 = vmatprep.subr.mxu0 0.0
        %v1087 = vand.u32 %v889, 4294901760
        %v1088 = vsub.f32 %v889, %v1087
        %v1089 = vand.u32 %v1088, 4294901760
        %v1090 = vsub.f32 %v1088, %v1089
        %v1091 = vand.u32 %v1090, 4294901760
        %1092 = vmatpush1.msra.mxu0 %v1091
        %1093 = vmatprep.subr.mxu0 0.0
        %1094 = vmatpush1.msra.mxu0 0.0
        %1095 = vmatprep.subr.mxu0 0.0
        %1096 = vmatpush1.msra.mxu0 0.0
        %1097 = vmatprep.subr.mxu0 0.0
        %1098 = vmatpush1.msra.mxu0 0.0
        %1099 = vmatprep.subr.mxu0 0.0
        %1100 = vmatpush1.msra.mxu0 0.0
        %1101 = vmatprep.subr.mxu0 0.0
        %1102 = vmatpush1.msra.mxu0 0.0
        %1103 = vmatprep.subr.mxu0 0.0
        %1104 = vmatpush1.msra.mxu0 0.0
        %1105 = vmatprep.subr.mxu0 0.0
        %1106 = vmatpush1.msra.mxu0 0.0
        %1107 = vmatprep.subr.mxu0 0.0
        %1108 = vmatpush1.msra.mxu0 0.0
        %1109 = vmatprep.subr.mxu0 0.0
        %1110 = vmatpush1.msra.mxu0 0.0
        %1111 = vmatprep.subr.mxu0 0.0
        %1112 = vmatpush1.msra.mxu0 0.0
        %1113 = vmatprep.subr.mxu0 0.0
        %1114 = vmatpush1.msra.mxu0 0.0
        %1115 = vmatprep.subr.mxu0 0.0
        %1116 = vmatpush1.msra.mxu0 0.0
        %1117 = vmatprep.subr.mxu0 0.0
        %1118 = vmatpush1.msra.mxu0 0.0
        %1119 = vmatprep.subr.mxu0 0.0
        %1120 = vmatpush1.msra.mxu0 0.0
        %1121 = vmatprep.subr.mxu0 0.0
        %1122 = vmatpush1.msra.mxu0 0.0
        %1123 = vmatprep.subr.mxu0 0.0
        %1124 = vmatpush1.msra.mxu0 0.0
        %1125 = vmatprep.mubr.f32.mxu0 0.0
        %v1126 = vand.u32 %v873, 4294901760
        %1127 = vmatmul.mubr.f32.gmra.mrb[0].mxu0 %v1126
        %v1128 = vpop.f32.mrb[0].mxu0
        %v1129 = vadd.f32 %v978, %v1128
        %v1130 = vpop.f32.mrb[0].mxu0
        %1131 = vdwg.mxu0
        %1132 = vmatprep.subr.mxu0 0.0
        %v1133 = vand.u32 %v874, 4294901760
        %v1134 = vsub.f32 %v874, %v1133
        %1135 = vmatpush1.msra.mxu0 %v1134
        %1136 = vmatprep.subr.mxu0 0.0
        %v1137 = vand.u32 %v875, 4294901760
        %v1138 = vsub.f32 %v875, %v1137
        %1139 = vmatpush1.msra.mxu0 %v1138
        %1140 = vmatprep.subr.mxu0 0.0
        %v1141 = vand.u32 %v876, 4294901760
        %v1142 = vsub.f32 %v876, %v1141
        %1143 = vmatpush1.msra.mxu0 %v1142
        %1144 = vmatprep.subr.mxu0 0.0
        %v1145 = vand.u32 %v877, 4294901760
        %v1146 = vsub.f32 %v877, %v1145
        %1147 = vmatpush1.msra.mxu0 %v1146
        %1148 = vmatprep.subr.mxu0 0.0
        %v1149 = vand.u32 %v878, 4294901760
        %v1150 = vsub.f32 %v878, %v1149
        %1151 = vmatpush1.msra.mxu0 %v1150
        %1152 = vmatprep.subr.mxu0 0.0
        %v1153 = vand.u32 %v879, 4294901760
        %v1154 = vsub.f32 %v879, %v1153
        %1155 = vmatpush1.msra.mxu0 %v1154
        %1156 = vmatprep.subr.mxu0 0.0
        %v1157 = vand.u32 %v880, 4294901760
        %v1158 = vsub.f32 %v880, %v1157
        %1159 = vmatpush1.msra.mxu0 %v1158
        %1160 = vmatprep.subr.mxu0 0.0
        %v1161 = vand.u32 %v881, 4294901760
        %v1162 = vsub.f32 %v881, %v1161
        %1163 = vmatpush1.msra.mxu0 %v1162
        %1164 = vmatprep.subr.mxu0 0.0
        %v1165 = vand.u32 %v882, 4294901760
        %v1166 = vsub.f32 %v882, %v1165
        %1167 = vmatpush1.msra.mxu0 %v1166
        %1168 = vmatprep.subr.mxu0 0.0
        %v1169 = vand.u32 %v883, 4294901760
        %v1170 = vsub.f32 %v883, %v1169
        %1171 = vmatpush1.msra.mxu0 %v1170
        %1172 = vmatprep.subr.mxu0 0.0
        %v1173 = vand.u32 %v884, 4294901760
        %v1174 = vsub.f32 %v884, %v1173
        %1175 = vmatpush1.msra.mxu0 %v1174
        %1176 = vmatprep.subr.mxu0 0.0
        %v1177 = vand.u32 %v885, 4294901760
        %v1178 = vsub.f32 %v885, %v1177
        %1179 = vmatpush1.msra.mxu0 %v1178
        %1180 = vmatprep.subr.mxu0 0.0
        %v1181 = vand.u32 %v886, 4294901760
        %v1182 = vsub.f32 %v886, %v1181
        %1183 = vmatpush1.msra.mxu0 %v1182
        %1184 = vmatprep.subr.mxu0 0.0
        %v1185 = vand.u32 %v887, 4294901760
        %v1186 = vsub.f32 %v887, %v1185
        %1187 = vmatpush1.msra.mxu0 %v1186
        %1188 = vmatprep.subr.mxu0 0.0
        %v1189 = vand.u32 %v888, 4294901760
        %v1190 = vsub.f32 %v888, %v1189
        %1191 = vmatpush1.msra.mxu0 %v1190
        %1192 = vmatprep.subr.mxu0 0.0
        %v1193 = vand.u32 %v889, 4294901760
        %v1194 = vsub.f32 %v889, %v1193
        %1195 = vmatpush1.msra.mxu0 %v1194
        %1196 = vmatprep.subr.mxu0 0.0
        %1197 = vmatpush1.msra.mxu0 0.0
        %1198 = vmatprep.subr.mxu0 0.0
        %1199 = vmatpush1.msra.mxu0 0.0
        %1200 = vmatprep.subr.mxu0 0.0
        %1201 = vmatpush1.msra.mxu0 0.0
        %1202 = vmatprep.subr.mxu0 0.0
        %1203 = vmatpush1.msra.mxu0 0.0
        %1204 = vmatprep.subr.mxu0 0.0
        %1205 = vmatpush1.msra.mxu0 0.0
        %1206 = vmatprep.subr.mxu0 0.0
        %1207 = vmatpush1.msra.mxu0 0.0
        %1208 = vmatprep.subr.mxu0 0.0
        %1209 = vmatpush1.msra.mxu0 0.0
        %1210 = vmatprep.subr.mxu0 0.0
        %1211 = vmatpush1.msra.mxu0 0.0
        %1212 = vmatprep.subr.mxu0 0.0
        %1213 = vmatpush1.msra.mxu0 0.0
        %1214 = vmatprep.subr.mxu0 0.0
        %1215 = vmatpush1.msra.mxu0 0.0
        %1216 = vmatprep.subr.mxu0 0.0
        %1217 = vmatpush1.msra.mxu0 0.0
        %1218 = vmatprep.subr.mxu0 0.0
        %1219 = vmatpush1.msra.mxu0 0.0
        %1220 = vmatprep.subr.mxu0 0.0
        %1221 = vmatpush1.msra.mxu0 0.0
        %1222 = vmatprep.subr.mxu0 0.0
        %1223 = vmatpush1.msra.mxu0 0.0
        %1224 = vmatprep.subr.mxu0 0.0
        %1225 = vmatpush1.msra.mxu0 0.0
        %1226 = vmatprep.subr.mxu0 0.0
        %1227 = vmatpush1.msra.mxu0 0.0
        %1228 = vmatprep.mubr.f32.mxu0 0.0
        %v1229 = vand.u32 %v873, 4294901760
        %v1230 = vsub.f32 %v873, %v1229
        %1231 = vmatmul.mubr.f32.gmra.mrb[0].mxu0 %v1230
        %v1232 = vpop.f32.mrb[0].mxu0
        %v1233 = vadd.f32 %v1129, %v1232
        %v1234 = vpop.f32.mrb[0].mxu0
        %1235 = vdwg.mxu0
        %1236 = vmatprep.subr.mxu0 0.0
        %v1237 = vand.u32 %v874, 4294901760
        %1238 = vmatpush1.msra.mxu0 %v1237
        %1239 = vmatprep.subr.mxu0 0.0
        %v1240 = vand.u32 %v875, 4294901760
        %1241 = vmatpush1.msra.mxu0 %v1240
        %1242 = vmatprep.subr.mxu0 0.0
        %v1243 = vand.u32 %v876, 4294901760
        %1244 = vmatpush1.msra.mxu0 %v1243
        %1245 = vmatprep.subr.mxu0 0.0
        %v1246 = vand.u32 %v877, 4294901760
        %1247 = vmatpush1.msra.mxu0 %v1246
        %1248 = vmatprep.subr.mxu0 0.0
        %v1249 = vand.u32 %v878, 4294901760
        %1250 = vmatpush1.msra.mxu0 %v1249
        %1251 = vmatprep.subr.mxu0 0.0
        %v1252 = vand.u32 %v879, 4294901760
        %1253 = vmatpush1.msra.mxu0 %v1252
        %1254 = vmatprep.subr.mxu0 0.0
        %v1255 = vand.u32 %v880, 4294901760
        %1256 = vmatpush1.msra.mxu0 %v1255
        %1257 = vmatprep.subr.mxu0 0.0
        %v1258 = vand.u32 %v881, 4294901760
        %1259 = vmatpush1.msra.mxu0 %v1258
        %1260 = vmatprep.subr.mxu0 0.0
        %v1261 = vand.u32 %v882, 4294901760
        %1262 = vmatpush1.msra.mxu0 %v1261
        %1263 = vmatprep.subr.mxu0 0.0
        %v1264 = vand.u32 %v883, 4294901760
        %1265 = vmatpush1.msra.mxu0 %v1264
        %1266 = vmatprep.subr.mxu0 0.0
        %v1267 = vand.u32 %v884, 4294901760
        %1268 = vmatpush1.msra.mxu0 %v1267
        %1269 = vmatprep.subr.mxu0 0.0
        %v1270 = vand.u32 %v885, 4294901760
        %1271 = vmatpush1.msra.mxu0 %v1270
        %1272 = vmatprep.subr.mxu0 0.0
        %v1273 = vand.u32 %v886, 4294901760
        %1274 = vmatpush1.msra.mxu0 %v1273
        %1275 = vmatprep.subr.mxu0 0.0
        %v1276 = vand.u32 %v887, 4294901760
        %1277 = vmatpush1.msra.mxu0 %v1276
        %1278 = vmatprep.subr.mxu0 0.0
        %v1279 = vand.u32 %v888, 4294901760
        %1280 = vmatpush1.msra.mxu0 %v1279
        %1281 = vmatprep.subr.mxu0 0.0
        %v1282 = vand.u32 %v889, 4294901760
        %1283 = vmatpush1.msra.mxu0 %v1282
        %1284 = vmatprep.subr.mxu0 0.0
        %1285 = vmatpush1.msra.mxu0 0.0
        %1286 = vmatprep.subr.mxu0 0.0
        %1287 = vmatpush1.msra.mxu0 0.0
        %1288 = vmatprep.subr.mxu0 0.0
        %1289 = vmatpush1.msra.mxu0 0.0
        %1290 = vmatprep.subr.mxu0 0.0
        %1291 = vmatpush1.msra.mxu0 0.0
        %1292 = vmatprep.subr.mxu0 0.0
        %1293 = vmatpush1.msra.mxu0 0.0
        %1294 = vmatprep.subr.mxu0 0.0
        %1295 = vmatpush1.msra.mxu0 0.0
        %1296 = vmatprep.subr.mxu0 0.0
        %1297 = vmatpush1.msra.mxu0 0.0
        %1298 = vmatprep.subr.mxu0 0.0
        %1299 = vmatpush1.msra.mxu0 0.0
        %1300 = vmatprep.subr.mxu0 0.0
        %1301 = vmatpush1.msra.mxu0 0.0
        %1302 = vmatprep.subr.mxu0 0.0
        %1303 = vmatpush1.msra.mxu0 0.0
        %1304 = vmatprep.subr.mxu0 0.0
        %1305 = vmatpush1.msra.mxu0 0.0
        %1306 = vmatprep.subr.mxu0 0.0
        %1307 = vmatpush1.msra.mxu0 0.0
        %1308 = vmatprep.subr.mxu0 0.0
        %1309 = vmatpush1.msra.mxu0 0.0
        %1310 = vmatprep.subr.mxu0 0.0
        %1311 = vmatpush1.msra.mxu0 0.0
        %1312 = vmatprep.subr.mxu0 0.0
        %1313 = vmatpush1.msra.mxu0 0.0
        %1314 = vmatprep.subr.mxu0 0.0
        %1315 = vmatpush1.msra.mxu0 0.0
        %1316 = vmatprep.mubr.f32.mxu0 0.0
        %v1317 = vand.u32 %v873, 4294901760
        %v1318 = vsub.f32 %v873, %v1317
        %v1319 = vand.u32 %v1318, 4294901760
        %1320 = vmatmul.mubr.f32.gmra.mrb[0].mxu0 %v1319
        %v1321 = vpop.f32.mrb[0].mxu0
        %v1322 = vadd.f32 %v1233, %v1321
        %v1323 = vpop.f32.mrb[0].mxu0
        %1324 = vdwg.mxu0
        %1325 = vmatprep.subr.mxu0 0.0
        %v1326 = vand.u32 %v874, 4294901760
        %v1327 = vsub.f32 %v874, %v1326
        %v1328 = vand.u32 %v1327, 4294901760
        %1329 = vmatpush1.msra.mxu0 %v1328
        %1330 = vmatprep.subr.mxu0 0.0
        %v1331 = vand.u32 %v875, 4294901760
        %v1332 = vsub.f32 %v875, %v1331
        %v1333 = vand.u32 %v1332, 4294901760
        %1334 = vmatpush1.msra.mxu0 %v1333
        %1335 = vmatprep.subr.mxu0 0.0
        %v1336 = vand.u32 %v876, 4294901760
        %v1337 = vsub.f32 %v876, %v1336
        %v1338 = vand.u32 %v1337, 4294901760
        %1339 = vmatpush1.msra.mxu0 %v1338
        %1340 = vmatprep.subr.mxu0 0.0
        %v1341 = vand.u32 %v877, 4294901760
        %v1342 = vsub.f32 %v877, %v1341
        %v1343 = vand.u32 %v1342, 4294901760
        %1344 = vmatpush1.msra.mxu0 %v1343
        %1345 = vmatprep.subr.mxu0 0.0
        %v1346 = vand.u32 %v878, 4294901760
        %v1347 = vsub.f32 %v878, %v1346
        %v1348 = vand.u32 %v1347, 4294901760
        %1349 = vmatpush1.msra.mxu0 %v1348
        %1350 = vmatprep.subr.mxu0 0.0
        %v1351 = vand.u32 %v879, 4294901760
        %v1352 = vsub.f32 %v879, %v1351
        %v1353 = vand.u32 %v1352, 4294901760
        %1354 = vmatpush1.msra.mxu0 %v1353
        %1355 = vmatprep.subr.mxu0 0.0
        %v1356 = vand.u32 %v880, 4294901760
        %v1357 = vsub.f32 %v880, %v1356
        %v1358 = vand.u32 %v1357, 4294901760
        %1359 = vmatpush1.msra.mxu0 %v1358
        %1360 = vmatprep.subr.mxu0 0.0
        %v1361 = vand.u32 %v881, 4294901760
        %v1362 = vsub.f32 %v881, %v1361
        %v1363 = vand.u32 %v1362, 4294901760
        %1364 = vmatpush1.msra.mxu0 %v1363
        %1365 = vmatprep.subr.mxu0 0.0
        %v1366 = vand.u32 %v882, 4294901760
        %v1367 = vsub.f32 %v882, %v1366
        %v1368 = vand.u32 %v1367, 4294901760
        %1369 = vmatpush1.msra.mxu0 %v1368
        %1370 = vmatprep.subr.mxu0 0.0
        %v1371 = vand.u32 %v883, 4294901760
        %v1372 = vsub.f32 %v883, %v1371
        %v1373 = vand.u32 %v1372, 4294901760
        %1374 = vmatpush1.msra.mxu0 %v1373
        %1375 = vmatprep.subr.mxu0 0.0
        %v1376 = vand.u32 %v884, 4294901760
        %v1377 = vsub.f32 %v884, %v1376
        %v1378 = vand.u32 %v1377, 4294901760
        %1379 = vmatpush1.msra.mxu0 %v1378
        %1380 = vmatprep.subr.mxu0 0.0
        %v1381 = vand.u32 %v885, 4294901760
        %v1382 = vsub.f32 %v885, %v1381
        %v1383 = vand.u32 %v1382, 4294901760
        %1384 = vmatpush1.msra.mxu0 %v1383
        %1385 = vmatprep.subr.mxu0 0.0
        %v1386 = vand.u32 %v886, 4294901760
        %v1387 = vsub.f32 %v886, %v1386
        %v1388 = vand.u32 %v1387, 4294901760
        %1389 = vmatpush1.msra.mxu0 %v1388
        %1390 = vmatprep.subr.mxu0 0.0
        %v1391 = vand.u32 %v887, 4294901760
        %v1392 = vsub.f32 %v887, %v1391
        %v1393 = vand.u32 %v1392, 4294901760
        %1394 = vmatpush1.msra.mxu0 %v1393
        %1395 = vmatprep.subr.mxu0 0.0
        %v1396 = vand.u32 %v888, 4294901760
        %v1397 = vsub.f32 %v888, %v1396
        %v1398 = vand.u32 %v1397, 4294901760
        %1399 = vmatpush1.msra.mxu0 %v1398
        %1400 = vmatprep.subr.mxu0 0.0
        %v1401 = vand.u32 %v889, 4294901760
        %v1402 = vsub.f32 %v889, %v1401
        %v1403 = vand.u32 %v1402, 4294901760
        %1404 = vmatpush1.msra.mxu0 %v1403
        %1405 = vmatprep.subr.mxu0 0.0
        %1406 = vmatpush1.msra.mxu0 0.0
        %1407 = vmatprep.subr.mxu0 0.0
        %1408 = vmatpush1.msra.mxu0 0.0
        %1409 = vmatprep.subr.mxu0 0.0
        %1410 = vmatpush1.msra.mxu0 0.0
        %1411 = vmatprep.subr.mxu0 0.0
        %1412 = vmatpush1.msra.mxu0 0.0
        %1413 = vmatprep.subr.mxu0 0.0
        %1414 = vmatpush1.msra.mxu0 0.0
        %1415 = vmatprep.subr.mxu0 0.0
        %1416 = vmatpush1.msra.mxu0 0.0
        %1417 = vmatprep.subr.mxu0 0.0
        %1418 = vmatpush1.msra.mxu0 0.0
        %1419 = vmatprep.subr.mxu0 0.0
        %1420 = vmatpush1.msra.mxu0 0.0
        %1421 = vmatprep.subr.mxu0 0.0
        %1422 = vmatpush1.msra.mxu0 0.0
        %1423 = vmatprep.subr.mxu0 0.0
        %1424 = vmatpush1.msra.mxu0 0.0
        %1425 = vmatprep.subr.mxu0 0.0
        %1426 = vmatpush1.msra.mxu0 0.0
        %1427 = vmatprep.subr.mxu0 0.0
        %1428 = vmatpush1.msra.mxu0 0.0
        %1429 = vmatprep.subr.mxu0 0.0
        %1430 = vmatpush1.msra.mxu0 0.0
        %1431 = vmatprep.subr.mxu0 0.0
        %1432 = vmatpush1.msra.mxu0 0.0
        %1433 = vmatprep.subr.mxu0 0.0
        %1434 = vmatpush1.msra.mxu0 0.0
        %1435 = vmatprep.subr.mxu0 0.0
        %1436 = vmatpush1.msra.mxu0 0.0
        %1437 = vmatprep.mubr.f32.mxu0 0.0
        %v1438 = vand.u32 %v873, 4294901760
        %1439 = vmatmul.mubr.f32.gmra.mrb[0].mxu0 %v1438
        %v1440 = vpop.f32.mrb[0].mxu0
        %v1441 = vadd.f32 %v1322, %v1440
        %v1442 = vpop.f32.mrb[0].mxu0
        %1443 = vdwg.mxu0
        %1444 = vmatprep.subr.mxu0 0.0
        %v1445 = vand.u32 %v874, 4294901760
        %1446 = vmatpush1.msra.mxu0 %v1445
        %1447 = vmatprep.subr.mxu0 0.0
        %v1448 = vand.u32 %v875, 4294901760
        %1449 = vmatpush1.msra.mxu0 %v1448
        %1450 = vmatprep.subr.mxu0 0.0
        %v1451 = vand.u32 %v876, 4294901760
        %1452 = vmatpush1.msra.mxu0 %v1451
        %1453 = vmatprep.subr.mxu0 0.0
        %v1454 = vand.u32 %v877, 4294901760
        %1455 = vmatpush1.msra.mxu0 %v1454
        %1456 = vmatprep.subr.mxu0 0.0
        %v1457 = vand.u32 %v878, 4294901760
        %1458 = vmatpush1.msra.mxu0 %v1457
        %1459 = vmatprep.subr.mxu0 0.0
        %v1460 = vand.u32 %v879, 4294901760
        %1461 = vmatpush1.msra.mxu0 %v1460
        %1462 = vmatprep.subr.mxu0 0.0
        %v1463 = vand.u32 %v880, 4294901760
        %1464 = vmatpush1.msra.mxu0 %v1463
        %1465 = vmatprep.subr.mxu0 0.0
        %v1466 = vand.u32 %v881, 4294901760
        %1467 = vmatpush1.msra.mxu0 %v1466
        %1468 = vmatprep.subr.mxu0 0.0
        %v1469 = vand.u32 %v882, 4294901760
        %1470 = vmatpush1.msra.mxu0 %v1469
        %1471 = vmatprep.subr.mxu0 0.0
        %v1472 = vand.u32 %v883, 4294901760
        %1473 = vmatpush1.msra.mxu0 %v1472
        %1474 = vmatprep.subr.mxu0 0.0
        %v1475 = vand.u32 %v884, 4294901760
        %1476 = vmatpush1.msra.mxu0 %v1475
        %1477 = vmatprep.subr.mxu0 0.0
        %v1478 = vand.u32 %v885, 4294901760
        %1479 = vmatpush1.msra.mxu0 %v1478
        %1480 = vmatprep.subr.mxu0 0.0
        %v1481 = vand.u32 %v886, 4294901760
        %1482 = vmatpush1.msra.mxu0 %v1481
        %1483 = vmatprep.subr.mxu0 0.0
        %v1484 = vand.u32 %v887, 4294901760
        %1485 = vmatpush1.msra.mxu0 %v1484
        %1486 = vmatprep.subr.mxu0 0.0
        %v1487 = vand.u32 %v888, 4294901760
        %1488 = vmatpush1.msra.mxu0 %v1487
        %1489 = vmatprep.subr.mxu0 0.0
        %v1490 = vand.u32 %v889, 4294901760
        %1491 = vmatpush1.msra.mxu0 %v1490
        %1492 = vmatprep.subr.mxu0 0.0
        %1493 = vmatpush1.msra.mxu0 0.0
        %1494 = vmatprep.subr.mxu0 0.0
        %1495 = vmatpush1.msra.mxu0 0.0
        %1496 = vmatprep.subr.mxu0 0.0
        %1497 = vmatpush1.msra.mxu0 0.0
        %1498 = vmatprep.subr.mxu0 0.0
        %1499 = vmatpush1.msra.mxu0 0.0
        %1500 = vmatprep.subr.mxu0 0.0
        %1501 = vmatpush1.msra.mxu0 0.0
        %1502 = vmatprep.subr.mxu0 0.0
        %1503 = vmatpush1.msra.mxu0 0.0
        %1504 = vmatprep.subr.mxu0 0.0
        %1505 = vmatpush1.msra.mxu0 0.0
        %1506 = vmatprep.subr.mxu0 0.0
        %1507 = vmatpush1.msra.mxu0 0.0
        %1508 = vmatprep.subr.mxu0 0.0
        %1509 = vmatpush1.msra.mxu0 0.0
        %1510 = vmatprep.subr.mxu0 0.0
        %1511 = vmatpush1.msra.mxu0 0.0
        %1512 = vmatprep.subr.mxu0 0.0
        %1513 = vmatpush1.msra.mxu0 0.0
        %1514 = vmatprep.subr.mxu0 0.0
        %1515 = vmatpush1.msra.mxu0 0.0
        %1516 = vmatprep.subr.mxu0 0.0
        %1517 = vmatpush1.msra.mxu0 0.0
        %1518 = vmatprep.subr.mxu0 0.0
        %1519 = vmatpush1.msra.mxu0 0.0
        %1520 = vmatprep.subr.mxu0 0.0
        %1521 = vmatpush1.msra.mxu0 0.0
        %1522 = vmatprep.subr.mxu0 0.0
        %1523 = vmatpush1.msra.mxu0 0.0
        %1524 = vmatprep.mubr.f32.mxu0 0.0
        %v1525 = vand.u32 %v873, 4294901760
        %1526 = vmatmul.mubr.f32.gmra.mrb[0].mxu0 %v1525
        %v1527 = vpop.f32.mrb[0].mxu0
        %v1528 = vadd.f32 %v1441, %v1527
        %v1529 = vpop.f32.mrb[0].mxu0
        %1530 = vdwg.mxu0
        %v1531 = vmax.f32 %v1528, 0.0
        %1532 = vst [vmem:[%s214] sm:$0xff] %v1531
        %s1533 = sand.u32 %s97, 1
        %s1534 = scalar_lea.sflag [#allocation4], %s1533
        %s1535 = sand.u32 %s97, 1
        %s1536 = smul.addr %s1535, 8
        %s1537 = scalar_lea.vmem [#allocation8], %s1536
        // Predicated region
        $region45: #{tpu_custom_call.1} parent=31 // pred_check
          %p1538 = pneg %p107
        $region46: #{tpu_custom_call.1} parent=31 // pred_check_branch
          %1540 = sbr.rel (%p1538) target = $region48
        $region47: #{tpu_custom_call.1} parent=31 // pred_region
          %s1542 = ssub.s32 128, 128
          %1543 = vsyncadd %s1534, %s1542
          %s1544 = smul.addr %s21, 128
          %s1545 = scalar_lea.hbm %s3, %s1544
          %s1547 = sshll.u32 %s1537, 4
          %s1548 = int_to_ptr.vmem [resolvable:$true] %s1547
          %1550 = dma.vmem_to_hbm [thread:$0]  %s1548, 128, %s1545, %s1534
        $region48: #{tpu_custom_call.1} parent=31 // pred_fallthru
          _
      $region32: #{tpu_custom_call.1} parent=5 // pred_fallthru
        _
      %p1551 = scmp.le.s32.totalorder 2, %s16
      // Predicated region
      $region49: #{tpu_custom_call.1} parent=5 // pred_check
        %p1552 = pneg %p1551
      $region50: #{tpu_custom_call.1} parent=5 // pred_check_branch
        %1554 = sbr.rel (%p1552) target = $region52
      $region51: #{tpu_custom_call.1} parent=5 // pred_region
        %s1555 = ssub.s32 %s16, 2
        // Predicated region
        $region53: #{tpu_custom_call.1} parent=51 // pred_check
          %p1556 = pneg %p113
        $region54: #{tpu_custom_call.1} parent=51 // pred_check_branch
          %1558 = sbr.rel (%p1556) target = $region56
        $region55: #{tpu_custom_call.1} parent=51 // pred_region
          %s1559 = sand.u32 %s98, 1
          %s1560 = scalar_lea.sflag [#allocation4], %s1559
          %s1561 = sand.u32 %s98, 1
          %s1562 = smul.addr %s1561, 8
          %s1563 = scalar_lea.vmem [#allocation8], %s1562
          %1564 = dma.done %s1560, 128
        $region56: #{tpu_custom_call.1} parent=51 // pred_fallthru
          _
      $region52: #{tpu_custom_call.1} parent=5 // pred_fallthru
        _
    $region6: #{tpu_custom_call.1} parent=1 // loop_footer
      %s20 = sadd.s32 1, %s16
    $region7: #{tpu_custom_call.1} parent=1 // loop_footer_branch
      %15 = sbr.rel target = $region3
    $region8: #{tpu_custom_call.1} parent=1 // loop_exit
      _
    %1565 = vsyncpa [#allocation3], 1
    %s1566 = scalar_lea.sflag [#allocation3], 1
    %1567 = vsyncpa %s1566, 1
    %1568 = vsyncpa [#allocation6], 1
    %1569 = vsyncpa [#allocation4], 1
    %s1570 = scalar_lea.sflag [#allocation4], 1
    %1571 = vsyncpa %s1570, 1

</llo_original>
